<compile_context>
chip_gen: v7x
topology: tpu7x:2x2x1
jax: 0.10.0
libtpu: 0.0.40
codegen_flags: <defaults>
</compile_context>

<pallas_src>
import functools

import jax
import jax.numpy as jnp
import numpy as np
from jax import lax
from jax.experimental import pallas as pl
from jax.experimental.pallas import tpu as pltpu


# ----------------------------------------------------------------------------
# Pallas kernel A: (bf16 A) @ (bf16 W) + b, optional ReLU, f32 accumulation.
# Used for conv1 / conv2 (on im2col patches). Gridded over M.
# ----------------------------------------------------------------------------
def _mm_bias_act_kernel(a_ref, w_ref, b_ref, o_ref, *, apply_relu):
    a = a_ref[...].astype(jnp.bfloat16)
    w = w_ref[...].astype(jnp.bfloat16)
    acc = jnp.dot(a, w, preferred_element_type=jnp.float32)
    acc = acc + b_ref[...].astype(jnp.float32)
    if apply_relu:
        acc = jnp.maximum(acc, 0.0)
    o_ref[...] = acc.astype(o_ref.dtype)


def mm_bias_act(a, w, b, *, apply_relu, out_dtype=jnp.bfloat16):
    """out = relu_maybe(a @ w + b); a:(M,K) w:(K,N) b:(N,). Gridded over M."""
    M, K = a.shape
    K2, N = w.shape
    assert K == K2, (K, K2)
    TM = min(512, M)
    if M % TM:
        TM = M                      # fall back to a single (full) block
    grid = (M // TM,)
    return pl.pallas_call(
        functools.partial(_mm_bias_act_kernel, apply_relu=apply_relu),
        out_shape=jax.ShapeDtypeStruct((M, N), out_dtype),
        grid=grid,
        in_specs=[
            pl.BlockSpec((TM, K), lambda i: (i, 0)),
            pl.BlockSpec((K, N), lambda i: (0, 0)),
            pl.BlockSpec((1, N), lambda i: (0, 0)),
        ],
        out_specs=pl.BlockSpec((TM, N), lambda i: (i, 0)),
        compiler_params=pltpu.CompilerParams(
            dimension_semantics=("parallel",)),
    )(a, w, b.reshape(1, N))


# ----------------------------------------------------------------------------
# Pallas kernel B: fused conv3 (as patch-matmul) + flatten + fc (+ relu + head)
# Everything fits VMEM; single block, no grid.
# ----------------------------------------------------------------------------
def _tail_kernel(p3_ref, w3_ref, b3_ref, wfc_ref, bfc_ref, *rest,
                 n_spat, batch, has_head):
    o_ref = rest[-1]
    w3 = w3_ref[...].astype(jnp.bfloat16)        # (K3, C3)
    b3 = b3_ref[...].astype(jnp.float32)         # (1, C3)
    bfc = bfc_ref[...].astype(jnp.float32)       # (1, F)
    feat = bfc_ref.shape[-1]

    acc = jnp.zeros((batch, feat), jnp.float32)
    # conv3 patch rows are ordered (spatial_position, batch); for each spatial
    # position p we apply conv3 and immediately contract the resulting 64
    # channels with the matching block of the fc weights -> no flatten reshape.
    for p in range(n_spat):
        a_p = p3_ref[pl.ds(p * batch, batch), :].astype(jnp.bfloat16)  # (B, K3)
        y3_p = jnp.dot(a_p, w3, preferred_element_type=jnp.float32) + b3
        y3_p = jnp.maximum(y3_p, 0.0).astype(jnp.bfloat16)             # (B, C3)
        wfc_p = wfc_ref[p].astype(jnp.bfloat16)                        # (C3, F)
        acc = acc + jnp.dot(y3_p, wfc_p, preferred_element_type=jnp.float32)
    acc = acc + bfc

    if has_head:
        whead_ref, bhead_ref = rest[0], rest[1]
        h = jnp.maximum(acc, 0.0).astype(jnp.bfloat16)
        out = jnp.dot(h, whead_ref[...].astype(jnp.bfloat16),
                      preferred_element_type=jnp.float32)
        out = out + bhead_ref[...].astype(jnp.float32)
    else:
        out = acc
    o_ref[...] = out.astype(o_ref.dtype)


def tail_fused(p3, prep, *, batch, n_spat, n_outputs):
    w3, b3 = prep["w3"], prep["b3"]          # (K3, C3), (C3,)
    wfc, bfc = prep["wfc"], prep["bfc"]      # (S, C3, F), (F,)
    K3, C3 = w3.shape
    F = wfc.shape[-1]
    assert wfc.shape == (n_spat, C3, F)

    args = [p3, w3, b3.reshape(1, C3), wfc, bfc.reshape(1, F)]
    in_specs = [
        pl.BlockSpec(p3.shape, lambda: (0, 0)),
        pl.BlockSpec(w3.shape, lambda: (0, 0)),
        pl.BlockSpec((1, C3), lambda: (0, 0)),
        pl.BlockSpec(wfc.shape, lambda: (0, 0, 0)),
        pl.BlockSpec((1, F), lambda: (0, 0)),
    ]
    if n_outputs:
        whead, bhead = prep["whead"], prep["bhead"]   # (F, n_out), (n_out,)
        n_out = whead.shape[1]
        args += [whead, bhead.reshape(1, n_out)]
        in_specs += [pl.BlockSpec(whead.shape, lambda: (0, 0)),
                     pl.BlockSpec((1, n_out), lambda: (0, 0))]
        out_dim = n_out
    else:
        out_dim = F

    return pl.pallas_call(
        functools.partial(_tail_kernel, n_spat=n_spat, batch=batch,
                          has_head=bool(n_outputs)),
        out_shape=jax.ShapeDtypeStruct((batch, out_dim), jnp.float32),
        in_specs=in_specs,
        out_specs=pl.BlockSpec((batch, out_dim), lambda: (0, 0)),
    )(*args)


# ----------------------------------------------------------------------------
# im2col glue: NHWC, built from static strided slices (no gather).
# Column order is (kh, kw, c); row order (b, oh, ow) or (oh, ow, b).
# ----------------------------------------------------------------------------
def _im2col_nhwc(x, kh, kw, stride, pad, *, spatial_major=False):
    B, H, W, C = x.shape
    OH = (H + 2 * pad - kh) // stride + 1
    OW = (W + 2 * pad - kw) // stride + 1
    xp = jnp.pad(x, ((0, 0), (pad, pad), (pad, pad), (0, 0)))
    wins = []
    for i in range(kh):
        for j in range(kw):
            win = lax.slice(
                xp,
                (0, i, j, 0),
                (B, i + (OH - 1) * stride + 1, j + (OW - 1) * stride + 1, C),
                (1, stride, stride, 1),
            )                                  # (B, OH, OW, C)
            wins.append(win)
    p = jnp.stack(wins, axis=3)                # (B, OH, OW, kh*kw, C)
    if spatial_major:
        p = p.transpose(1, 2, 0, 3, 4).reshape(OH * OW * B, kh * kw * C)
    else:
        p = p.reshape(B * OH * OW, kh * kw * C)
    return p, OH, OW


# ----------------------------------------------------------------------------
# Parameters: torch-layout init + one-time preparation into kernel layout.
# ----------------------------------------------------------------------------
def init_sonic_cnn_params(key, input_shape, features_dim, n_outputs):
    C, H, W = input_shape
    # NOTE: this reproduces the module's expression, which parses as
    # ((H // 8) * W) // 8; it equals (H//8)*(W//8) for these demo shapes.
    conv_out_spat = H // (4 * 2) * W // (4 * 2)
    ks = jax.random.split(key, 10)

    def winit(k, shape, fan_in):
        return (jax.random.normal(k, shape, jnp.float32) / np.sqrt(fan_in))

    params = {
        "w1": winit(ks[0], (32, C, 9, 9), C * 81),
        "b1": winit(ks[1], (32,), C * 81),
        "w2": winit(ks[2], (64, 32, 5, 5), 32 * 25),
        "b2": winit(ks[3], (64,), 32 * 25),
        "w3": winit(ks[4], (64, 64, 3, 3), 64 * 9),
        "b3": winit(ks[5], (64,), 64 * 9),
        "wfc": winit(ks[6], (features_dim, 64 * conv_out_spat), 64 * conv_out_spat),
        "bfc": winit(ks[7], (features_dim,), 64 * conv_out_spat),
    }
    if n_outputs:
        params["whead"] = winit(ks[8], (n_outputs, features_dim), features_dim)
        params["bhead"] = winit(ks[9], (n_outputs,), features_dim)
    return params


def _conv_out_hw(H, W):
    OH1 = (H + 2 * 4 - 9) // 4 + 1
    OW1 = (W + 2 * 4 - 9) // 4 + 1
    OH3 = (OH1 + 2 * 2 - 5) // 2 + 1      # conv3 is 'same', stride 1
    OW3 = (OW1 + 2 * 2 - 5) // 2 + 1
    return OH3, OW3


def prepare_params(params, input_shape, n_outputs):
    """One-time conversion of torch-layout params to kernel-ready tensors."""
    _, H, W = input_shape
    OH3, OW3 = _conv_out_hw(H, W)
    S = OH3 * OW3
    F = params["wfc"].shape[0]
    assert params["wfc"].shape[1] == 64 * S, (params["wfc"].shape, S)

    def conv_w(w):                         # (OC, IC, KH, KW) -> (KH*KW*IC, OC)
        OC, IC, KH, KW = w.shape
        return jnp.transpose(w, (2, 3, 1, 0)).reshape(KH * KW * IC, OC)

    # fc weight: torch flatten order is (c, p); regroup per spatial position p.
    wfc = params["wfc"].reshape(F, 64, S)            # [f, c, p]
    wfc = jnp.transpose(wfc, (2, 1, 0))              # (S, 64, F)

    prep = {
        # obs/128 is folded into the conv1 weights (exact: power-of-two scale).
        "w1": (conv_w(params["w1"]) / 128.0).astype(jnp.bfloat16),
        "b1": params["b1"].astype(jnp.float32),
        "w2": conv_w(params["w2"]).astype(jnp.bfloat16),
        "b2": params["b2"].astype(jnp.float32),
        "w3": conv_w(params["w3"]).astype(jnp.bfloat16),
        "b3": params["b3"].astype(jnp.float32),
        "wfc": wfc.astype(jnp.bfloat16),
        "bfc": params["bfc"].astype(jnp.float32),
    }
    if n_outputs:
        prep["whead"] = params["whead"].T.astype(jnp.bfloat16)   # (F, n_out)
        prep["bhead"] = params["bhead"].astype(jnp.float32)
    return prep


# ----------------------------------------------------------------------------
# Forward pass (3 pallas_calls: conv1, conv2, fused conv3+fc+head)
# ----------------------------------------------------------------------------
def sonic_cnn_forward(prep, obs_nchw, *, n_outputs):
    # Single layout change: NCHW (module convention) -> NHWC (lane = channels).
    x = jnp.transpose(obs_nchw, (0, 2, 3, 1)).astype(jnp.bfloat16)
    B = x.shape[0]

    # conv1: 9x9 / stride 4 / pad 4 (obs/128 folded into w1)
    p1, OH1, OW1 = _im2col_nhwc(x, 9, 9, 4, 4)
    y1 = mm_bias_act(p1, prep["w1"], prep["b1"], apply_relu=True)
    y1 = y1.reshape(B, OH1, OW1, 32)

    # conv2: 5x5 / stride 2 / pad 2
    p2, OH2, OW2 = _im2col_nhwc(y1, 5, 5, 2, 2)
    y2 = mm_bias_act(p2, prep["w2"], prep["b2"], apply_relu=True)
    y2 = y2.reshape(B, OH2, OW2, 64)

    # conv3 (3x3 'same') + flatten + fc (+relu + head), fused in one kernel.
    p3, OH3, OW3 = _im2col_nhwc(y2, 3, 3, 1, 1, spatial_major=True)
    return tail_fused(p3, prep, batch=B, n_spat=OH3 * OW3, n_outputs=n_outputs)


# ----------------------------------------------------------------------------
# References
# ----------------------------------------------------------------------------
def sonic_cnn_ref_f32(params, obs, n_outputs):
    """Full-precision reference matching the PyTorch module semantics."""
    x = obs / 128.0

    def conv(x, w, b, stride, pad):
        y = lax.conv_general_dilated(
            x, w, (stride, stride), [(pad, pad), (pad, pad)],
            dimension_numbers=("NCHW", "OIHW", "NCHW"),
            precision=lax.Precision.HIGHEST)
        return jax.nn.relu(y + b[None, :, None, None])

    x = conv(x, params["w1"], params["b1"], 4, 4)
    x = conv(x, params["w2"], params["b2"], 2, 2)
    x = conv(x, params["w3"], params["b3"], 1, 1)
    x = x.reshape(x.shape[0], -1)
    x = jnp.dot(x, params["wfc"].T, precision=lax.Precision.HIGHEST) + params["bfc"]
    if n_outputs:
        x = jax.nn.relu(x)
        x = jnp.dot(x, params["whead"].T, precision=lax.Precision.HIGHEST) + params["bhead"]
    return x


def sonic_cnn_ref_matched(prep, obs, *, n_outputs):
    """Pure-JAX model of the exact kernel arithmetic (bf16 inputs, f32 accum)."""
    B = obs.shape[0]

    def mm(a, w, b, relu, out_dtype):
        y = jnp.dot(a.astype(jnp.bfloat16), w.astype(jnp.bfloat16),
                    preferred_element_type=jnp.float32) + b.astype(jnp.float32)
        if relu:
            y = jnp.maximum(y, 0.0)
        return y.astype(out_dtype)

    x = jnp.transpose(obs, (0, 2, 3, 1)).astype(jnp.bfloat16)
    p1, OH1, OW1 = _im2col_nhwc(x, 9, 9, 4, 4)
    y1 = mm(p1, prep["w1"], prep["b1"], True, jnp.bfloat16).reshape(B, OH1, OW1, 32)
    p2, OH2, OW2 = _im2col_nhwc(y1, 5, 5, 2, 2)
    y2 = mm(p2, prep["w2"], prep["b2"], True, jnp.bfloat16).reshape(B, OH2, OW2, 64)
    p3, OH3, OW3 = _im2col_nhwc(y2, 3, 3, 1, 1, spatial_major=True)
    S = OH3 * OW3
    F = prep["bfc"].shape[0]

    acc = jnp.zeros((B, F), jnp.float32)
    for p in range(S):
        y3_p = mm(p3[p * B:(p + 1) * B, :], prep["w3"], prep["b3"], True, jnp.bfloat16)
        acc = acc + jnp.dot(y3_p, prep["wfc"][p].astype(jnp.bfloat16),
                            preferred_element_type=jnp.float32)
    acc = acc + prep["bfc"]
    if n_outputs:
        h = jnp.maximum(acc, 0.0).astype(jnp.bfloat16)
        acc = jnp.dot(h, prep["whead"].astype(jnp.bfloat16),
                      preferred_element_type=jnp.float32) + prep["bhead"]
    return acc


# ----------------------------------------------------------------------------
if __name__ == "__main__":
    B, C, H, W = 2, 4, 16, 16
    features_dim = 64
    n_outputs = 8

    key = jax.random.PRNGKey(0)
    k_obs, k_par = jax.random.split(key)
    obs = jax.random.uniform(k_obs, (B, C, H, W), jnp.float32, 0.0, 255.0)
    params = init_sonic_cnn_params(k_par, (C, H, W), features_dim, n_outputs)
    prep = prepare_params(params, (C, H, W), n_outputs)

    fwd = jax.jit(functools.partial(sonic_cnn_forward, n_outputs=n_outputs))
    out = jax.block_until_ready(fwd(prep, obs))
    assert out.shape == (B, n_outputs), out.shape

    # Tight check against a pure-JAX model of the same bf16/f32 arithmetic:
    ref_m = jax.block_until_ready(
        sonic_cnn_ref_matched(prep, obs, n_outputs=n_outputs))
    np.testing.assert_allclose(np.asarray(out), np.asarray(ref_m),
                               rtol=1e-3, atol=1e-3)

    # Loose semantic check against the full-precision PyTorch-equivalent model
    # (bf16 MXU inputs through 5 layers -> allow a few percent).
    ref_f = jax.block_until_ready(sonic_cnn_ref_f32(params, obs, n_outputs))
    np.testing.assert_allclose(np.asarray(out), np.asarray(ref_f),
                               rtol=5e-2, atol=5e-2)

    print("KERNEL_OK")
</pallas_src>

<mosaic_0001>
module attributes {stable_mosaic.version = 11 : i64} {
  func.func @_mm_bias_act_kernel(%arg0: i32, %arg1: memref<32x324xbf16, #tpu.memory_space<vmem>>, %arg2: memref<324x32xbf16, #tpu.memory_space<vmem>>, %arg3: memref<1x32xf32, #tpu.memory_space<vmem>>, %arg4: memref<32x32xbf16, #tpu.memory_space<vmem>>) attributes {dimension_semantics = [#tpu.dimension_semantics<parallel>], iteration_bounds = array<i64: 1>, scalar_prefetch = 0 : i64, scratch_operands = 0 : i64, tpu.core_type = #tpu.core_type<tc>, window_params = [{transform_indices = @transform_0, window_bounds = array<i64: 32, 324>}, {pipeline_mode = #tpu.pipeline_mode<synchronous>, transform_indices = @transform_1, window_bounds = array<i64: 324, 32>}, {pipeline_mode = #tpu.pipeline_mode<synchronous>, transform_indices = @transform_2, window_bounds = array<i64: 1, 32>}, {transform_indices = @transform_3, window_bounds = array<i64: 32, 32>}]} {
    %c0 = arith.constant 0 : index
    %c0_0 = arith.constant 0 : index
    %0 = vector.load %arg1[%c0, %c0_0] : memref<32x324xbf16, #tpu.memory_space<vmem>>, vector<32x324xbf16>
    %c0_1 = arith.constant 0 : index
    %c0_2 = arith.constant 0 : index
    %1 = vector.load %arg2[%c0_1, %c0_2] : memref<324x32xbf16, #tpu.memory_space<vmem>>, vector<324x32xbf16>
    %cst = arith.constant dense<0.000000e+00> : vector<32x32xf32>
    %2 = tpu.matmul %0, %1, %cst {dimension_numbers = #tpu.dot_dimension_numbers<[1], [0], [0], [1], [0, 0, 1, 1], [], []>} : vector<32x324xbf16>, vector<324x32xbf16>, vector<32x32xf32> -> vector<32x32xf32>
    %c0_3 = arith.constant 0 : index
    %c0_4 = arith.constant 0 : index
    %3 = vector.load %arg3[%c0_3, %c0_4] : memref<1x32xf32, #tpu.memory_space<vmem>>, vector<1x32xf32>
    %4 = vector.broadcast %3 : vector<1x32xf32> to vector<32x32xf32>
    %5 = arith.addf %2, %4 : vector<32x32xf32>
    %cst_5 = arith.constant 0.000000e+00 : f32
    %6 = vector.broadcast %cst_5 : f32 to vector<32x32xf32>
    %7 = arith.maximumf %5, %6 : vector<32x32xf32>
    %8 = arith.truncf %7 : vector<32x32xf32> to vector<32x32xbf16>
    %c0_6 = arith.constant 0 : index
    %c0_7 = arith.constant 0 : index
    %9 = vector.load %arg4[%c0_6, %c0_7] : memref<32x32xbf16, #tpu.memory_space<vmem>>, vector<32x32xbf16>
    tpu.vector_store %arg4[%c0_6, %c0_7], %8 {strides = array<i32>} : memref<32x32xbf16, #tpu.memory_space<vmem>>, vector<32x32xbf16>,
    return
  }
  func.func @transform_0(%arg0: i32) -> (i32, i32) {
    %c0_i32 = arith.constant 0 : i32
    %c0_i32_0 = arith.constant 0 : i32
    return %arg0, %c0_i32 : i32, i32
  }
  func.func @transform_1(%arg0: i32) -> (i32, i32) {
    %c0_i32 = arith.constant 0 : i32
    %c0_i32_0 = arith.constant 0 : i32
    %c0_i32_1 = arith.constant 0 : i32
    return %c0_i32, %c0_i32_0 : i32, i32
  }
  func.func @transform_2(%arg0: i32) -> (i32, i32) {
    %c0_i32 = arith.constant 0 : i32
    %c0_i32_0 = arith.constant 0 : i32
    %c0_i32_1 = arith.constant 0 : i32
    return %c0_i32, %c0_i32_0 : i32, i32
  }
  func.func @transform_3(%arg0: i32) -> (i32, i32) {
    %c0_i32 = arith.constant 0 : i32
    %c0_i32_0 = arith.constant 0 : i32
    return %arg0, %c0_i32 : i32, i32
  }
}

module attributes {stable_mosaic.version = 11 : i64} {
  func.func @_mm_bias_act_kernel(%arg0: i32, %arg1: memref<8x800xbf16, #tpu.memory_space<vmem>>, %arg2: memref<800x64xbf16, #tpu.memory_space<vmem>>, %arg3: memref<1x64xf32, #tpu.memory_space<vmem>>, %arg4: memref<8x64xbf16, #tpu.memory_space<vmem>>) attributes {dimension_semantics = [#tpu.dimension_semantics<parallel>], iteration_bounds = array<i64: 1>, scalar_prefetch = 0 : i64, scratch_operands = 0 : i64, tpu.core_type = #tpu.core_type<tc>, window_params = [{transform_indices = @transform_0, window_bounds = array<i64: 8, 800>}, {pipeline_mode = #tpu.pipeline_mode<synchronous>, transform_indices = @transform_1, window_bounds = array<i64: 800, 64>}, {pipeline_mode = #tpu.pipeline_mode<synchronous>, transform_indices = @transform_2, window_bounds = array<i64: 1, 64>}, {transform_indices = @transform_3, window_bounds = array<i64: 8, 64>}]} {
    %c0 = arith.constant 0 : index
    %c0_0 = arith.constant 0 : index
    %0 = vector.load %arg1[%c0, %c0_0] : memref<8x800xbf16, #tpu.memory_space<vmem>>, vector<8x800xbf16>
    %c0_1 = arith.constant 0 : index
    %c0_2 = arith.constant 0 : index
    %1 = vector.load %arg2[%c0_1, %c0_2] : memref<800x64xbf16, #tpu.memory_space<vmem>>, vector<800x64xbf16>
    %cst = arith.constant dense<0.000000e+00> : vector<8x64xf32>
    %2 = tpu.matmul %0, %1, %cst {dimension_numbers = #tpu.dot_dimension_numbers<[1], [0], [0], [1], [0, 0, 1, 1], [], []>} : vector<8x800xbf16>, vector<800x64xbf16>, vector<8x64xf32> -> vector<8x64xf32>
    %c0_3 = arith.constant 0 : index
    %c0_4 = arith.constant 0 : index
    %3 = vector.load %arg3[%c0_3, %c0_4] : memref<1x64xf32, #tpu.memory_space<vmem>>, vector<1x64xf32>
    %4 = vector.broadcast %3 : vector<1x64xf32> to vector<8x64xf32>
    %5 = arith.addf %2, %4 : vector<8x64xf32>
    %cst_5 = arith.constant 0.000000e+00 : f32
    %6 = vector.broadcast %cst_5 : f32 to vector<8x64xf32>
    %7 = arith.maximumf %5, %6 : vector<8x64xf32>
    %8 = arith.truncf %7 : vector<8x64xf32> to vector<8x64xbf16>
    %c0_6 = arith.constant 0 : index
    %c0_7 = arith.constant 0 : index
    %9 = vector.load %arg4[%c0_6, %c0_7] : memref<8x64xbf16, #tpu.memory_space<vmem>>, vector<8x64xbf16>
    tpu.vector_store %arg4[%c0_6, %c0_7], %8 {strides = array<i32>} : memref<8x64xbf16, #tpu.memory_space<vmem>>, vector<8x64xbf16>,
    return
  }
  func.func @transform_0(%arg0: i32) -> (i32, i32) {
    %c0_i32 = arith.constant 0 : i32
    %c0_i32_0 = arith.constant 0 : i32
    return %arg0, %c0_i32 : i32, i32
  }
  func.func @transform_1(%arg0: i32) -> (i32, i32) {
    %c0_i32 = arith.constant 0 : i32
    %c0_i32_0 = arith.constant 0 : i32
    %c0_i32_1 = arith.constant 0 : i32
    return %c0_i32, %c0_i32_0 : i32, i32
  }
  func.func @transform_2(%arg0: i32) -> (i32, i32) {
    %c0_i32 = arith.constant 0 : i32
    %c0_i32_0 = arith.constant 0 : i32
    %c0_i32_1 = arith.constant 0 : i32
    return %c0_i32, %c0_i32_0 : i32, i32
  }
  func.func @transform_3(%arg0: i32) -> (i32, i32) {
    %c0_i32 = arith.constant 0 : i32
    %c0_i32_0 = arith.constant 0 : i32
    return %arg0, %c0_i32 : i32, i32
  }
}

module attributes {stable_mosaic.version = 11 : i64} {
  func.func @_tail_kernel(%arg0: memref<8x576xbf16, #tpu.memory_space<vmem>>, %arg1: memref<576x64xbf16, #tpu.memory_space<vmem>>, %arg2: memref<1x64xf32, #tpu.memory_space<vmem>>, %arg3: memref<4x64x64xbf16, #tpu.memory_space<vmem>>, %arg4: memref<1x64xf32, #tpu.memory_space<vmem>>, %arg5: memref<64x8xbf16, #tpu.memory_space<vmem>>, %arg6: memref<1x8xf32, #tpu.memory_space<vmem>>, %arg7: memref<2x8xf32, #tpu.memory_space<vmem>>) attributes {dimension_semantics = [], scalar_prefetch = 0 : i64, scratch_operands = 0 : i64, tpu.core_type = #tpu.core_type<tc>} {
    %c0 = arith.constant 0 : index
    %c0_0 = arith.constant 0 : index
    %0 = vector.load %arg1[%c0, %c0_0] : memref<576x64xbf16, #tpu.memory_space<vmem>>, vector<576x64xbf16>
    %c0_1 = arith.constant 0 : index
    %c0_2 = arith.constant 0 : index
    %1 = vector.load %arg2[%c0_1, %c0_2] : memref<1x64xf32, #tpu.memory_space<vmem>>, vector<1x64xf32>
    %c0_3 = arith.constant 0 : index
    %c0_4 = arith.constant 0 : index
    %2 = vector.load %arg4[%c0_3, %c0_4] : memref<1x64xf32, #tpu.memory_space<vmem>>, vector<1x64xf32>
    %cst = arith.constant 0.000000e+00 : f32
    %3 = vector.broadcast %cst : f32 to vector<2x64xf32>
    %c0_5 = arith.constant 0 : index
    %c0_6 = arith.constant 0 : index
    %4 = vector.load %arg0[%c0_5, %c0_6] : memref<8x576xbf16, #tpu.memory_space<vmem>>, vector<2x576xbf16>
    %cst_7 = arith.constant dense<0.000000e+00> : vector<2x64xf32>
    %5 = tpu.matmul %4, %0, %cst_7 {dimension_numbers = #tpu.dot_dimension_numbers<[1], [0], [0], [1], [0, 0, 1, 1], [], []>} : vector<2x576xbf16>, vector<576x64xbf16>, vector<2x64xf32> -> vector<2x64xf32>
    %6 = vector.broadcast %1 : vector<1x64xf32> to vector<2x64xf32>
    %7 = arith.addf %5, %6 : vector<2x64xf32>
    %cst_8 = arith.constant 0.000000e+00 : f32
    %8 = vector.broadcast %cst_8 : f32 to vector<2x64xf32>
    %9 = arith.maximumf %7, %8 : vector<2x64xf32>
    %10 = arith.truncf %9 : vector<2x64xf32> to vector<2x64xbf16>
    %c0_9 = arith.constant 0 : index
    %c0_10 = arith.constant 0 : index
    %c0_11 = arith.constant 0 : index
    %11 = vector.load %arg3[%c0_9, %c0_10, %c0_11] : memref<4x64x64xbf16, #tpu.memory_space<vmem>>, vector<1x64x64xbf16>
    %12 = vector.shape_cast %11 : vector<1x64x64xbf16> to vector<64x64xbf16>
    %cst_12 = arith.constant dense<0.000000e+00> : vector<2x64xf32>
    %13 = tpu.matmul %10, %12, %cst_12 {dimension_numbers = #tpu.dot_dimension_numbers<[1], [0], [0], [1], [0, 0, 1, 1], [], []>} : vector<2x64xbf16>, vector<64x64xbf16>, vector<2x64xf32> -> vector<2x64xf32>
    %14 = arith.addf %3, %13 : vector<2x64xf32>
    %c2 = arith.constant 2 : index
    %c0_13 = arith.constant 0 : index
    %15 = vector.load %arg0[%c2, %c0_13] : memref<8x576xbf16, #tpu.memory_space<vmem>>, vector<2x576xbf16>
    %cst_14 = arith.constant dense<0.000000e+00> : vector<2x64xf32>
    %16 = tpu.matmul %15, %0, %cst_14 {dimension_numbers = #tpu.dot_dimension_numbers<[1], [0], [0], [1], [0, 0, 1, 1], [], []>} : vector<2x576xbf16>, vector<576x64xbf16>, vector<2x64xf32> -> vector<2x64xf32>
    %17 = vector.broadcast %1 : vector<1x64xf32> to vector<2x64xf32>
    %18 = arith.addf %16, %17 : vector<2x64xf32>
    %cst_15 = arith.constant 0.000000e+00 : f32
    %19 = vector.broadcast %cst_15 : f32 to vector<2x64xf32>
    %20 = arith.maximumf %18, %19 : vector<2x64xf32>
    %21 = arith.truncf %20 : vector<2x64xf32> to vector<2x64xbf16>
    %c1 = arith.constant 1 : index
    %c0_16 = arith.constant 0 : index
    %c0_17 = arith.constant 0 : index
    %22 = vector.load %arg3[%c1, %c0_16, %c0_17] : memref<4x64x64xbf16, #tpu.memory_space<vmem>>, vector<1x64x64xbf16>
    %23 = vector.shape_cast %22 : vector<1x64x64xbf16> to vector<64x64xbf16>
    %cst_18 = arith.constant dense<0.000000e+00> : vector<2x64xf32>
    %24 = tpu.matmul %21, %23, %cst_18 {dimension_numbers = #tpu.dot_dimension_numbers<[1], [0], [0], [1], [0, 0, 1, 1], [], []>} : vector<2x64xbf16>, vector<64x64xbf16>, vector<2x64xf32> -> vector<2x64xf32>
    %25 = arith.addf %14, %24 : vector<2x64xf32>
    %c4 = arith.constant 4 : index
    %c0_19 = arith.constant 0 : index
    %26 = vector.load %arg0[%c4, %c0_19] : memref<8x576xbf16, #tpu.memory_space<vmem>>, vector<2x576xbf16>
    %cst_20 = arith.constant dense<0.000000e+00> : vector<2x64xf32>
    %27 = tpu.matmul %26, %0, %cst_20 {dimension_numbers = #tpu.dot_dimension_numbers<[1], [0], [0], [1], [0, 0, 1, 1], [], []>} : vector<2x576xbf16>, vector<576x64xbf16>, vector<2x64xf32> -> vector<2x64xf32>
    %28 = vector.broadcast %1 : vector<1x64xf32> to vector<2x64xf32>
    %29 = arith.addf %27, %28 : vector<2x64xf32>
    %cst_21 = arith.constant 0.000000e+00 : f32
    %30 = vector.broadcast %cst_21 : f32 to vector<2x64xf32>
    %31 = arith.maximumf %29, %30 : vector<2x64xf32>
    %32 = arith.truncf %31 : vector<2x64xf32> to vector<2x64xbf16>
    %c2_22 = arith.constant 2 : index
    %c0_23 = arith.constant 0 : index
    %c0_24 = arith.constant 0 : index
    %33 = vector.load %arg3[%c2_22, %c0_23, %c0_24] : memref<4x64x64xbf16, #tpu.memory_space<vmem>>, vector<1x64x64xbf16>
    %34 = vector.shape_cast %33 : vector<1x64x64xbf16> to vector<64x64xbf16>
    %cst_25 = arith.constant dense<0.000000e+00> : vector<2x64xf32>
    %35 = tpu.matmul %32, %34, %cst_25 {dimension_numbers = #tpu.dot_dimension_numbers<[1], [0], [0], [1], [0, 0, 1, 1], [], []>} : vector<2x64xbf16>, vector<64x64xbf16>, vector<2x64xf32> -> vector<2x64xf32>
    %36 = arith.addf %25, %35 : vector<2x64xf32>
    %c6 = arith.constant 6 : index
    %c0_26 = arith.constant 0 : index
    %37 = vector.load %arg0[%c6, %c0_26] : memref<8x576xbf16, #tpu.memory_space<vmem>>, vector<2x576xbf16>
    %cst_27 = arith.constant dense<0.000000e+00> : vector<2x64xf32>
    %38 = tpu.matmul %37, %0, %cst_27 {dimension_numbers = #tpu.dot_dimension_numbers<[1], [0], [0], [1], [0, 0, 1, 1], [], []>} : vector<2x576xbf16>, vector<576x64xbf16>, vector<2x64xf32> -> vector<2x64xf32>
    %39 = vector.broadcast %1 : vector<1x64xf32> to vector<2x64xf32>
    %40 = arith.addf %38, %39 : vector<2x64xf32>
    %cst_28 = arith.constant 0.000000e+00 : f32
    %41 = vector.broadcast %cst_28 : f32 to vector<2x64xf32>
    %42 = arith.maximumf %40, %41 : vector<2x64xf32>
    %43 = arith.truncf %42 : vector<2x64xf32> to vector<2x64xbf16>
    %c3 = arith.constant 3 : index
    %c0_29 = arith.constant 0 : index
    %c0_30 = arith.constant 0 : index
    %44 = vector.load %arg3[%c3, %c0_29, %c0_30] : memref<4x64x64xbf16, #tpu.memory_space<vmem>>, vector<1x64x64xbf16>
    %45 = vector.shape_cast %44 : vector<1x64x64xbf16> to vector<64x64xbf16>
    %cst_31 = arith.constant dense<0.000000e+00> : vector<2x64xf32>
    %46 = tpu.matmul %43, %45, %cst_31 {dimension_numbers = #tpu.dot_dimension_numbers<[1], [0], [0], [1], [0, 0, 1, 1], [], []>} : vector<2x64xbf16>, vector<64x64xbf16>, vector<2x64xf32> -> vector<2x64xf32>
    %47 = arith.addf %36, %46 : vector<2x64xf32>
    %48 = vector.broadcast %2 : vector<1x64xf32> to vector<2x64xf32>
    %49 = arith.addf %47, %48 : vector<2x64xf32>
    %cst_32 = arith.constant 0.000000e+00 : f32
    %50 = vector.broadcast %cst_32 : f32 to vector<2x64xf32>
    %51 = arith.maximumf %49, %50 : vector<2x64xf32>
    %52 = arith.truncf %51 : vector<2x64xf32> to vector<2x64xbf16>
    %c0_33 = arith.constant 0 : index
    %c0_34 = arith.constant 0 : index
    %53 = vector.load %arg5[%c0_33, %c0_34] : memref<64x8xbf16, #tpu.memory_space<vmem>>, vector<64x8xbf16>
    %cst_35 = arith.constant dense<0.000000e+00> : vector<2x8xf32>
    %54 = tpu.matmul %52, %53, %cst_35 {dimension_numbers = #tpu.dot_dimension_numbers<[1], [0], [0], [1], [0, 0, 1, 1], [], []>} : vector<2x64xbf16>, vector<64x8xbf16>, vector<2x8xf32> -> vector<2x8xf32>
    %c0_36 = arith.constant 0 : index
    %c0_37 = arith.constant 0 : index
    %55 = vector.load %arg6[%c0_36, %c0_37] : memref<1x8xf32, #tpu.memory_space<vmem>>, vector<1x8xf32>
    %56 = vector.broadcast %55 : vector<1x8xf32> to vector<2x8xf32>
    %57 = arith.addf %54, %56 : vector<2x8xf32>
    %c0_38 = arith.constant 0 : index
    %c0_39 = arith.constant 0 : index
    %58 = vector.load %arg7[%c0_38, %c0_39] : memref<2x8xf32, #tpu.memory_space<vmem>>, vector<2x8xf32>
    tpu.vector_store %arg7[%c0_38, %c0_39], %57 {strides = array<i32>} : memref<2x8xf32, #tpu.memory_space<vmem>>, vector<2x8xf32>,
    return
  }
}

</mosaic_0001>

<llo_original>
// kernel: sonic_cnn_forward.3
$region0: #{sonic_cnn_forward.3}
  #allocation0 [shape = 'u32[]', space=smem, size = 0x4, offset = 0x4, fixed_abs, tag = 'smem constant byte address 0x4 - core index']
  #allocation1 [shape = 'u32[144,128]{1,0:T(1,128)}', space=vmem, size = 0x12000, scoped, tag = 'internal scratch']
  %s0 = inlined_call_operand.vmem [shape: bf16[32,324], index: 0, kind: input, shape index: {}]
  %s1 = inlined_call_operand.vmem [shape: bf16[324,32], index: 1, kind: input, shape index: {}]
  %s2 = inlined_call_operand.vmem [shape: f32[1,32], index: 2, kind: input, shape index: {}]
  %s3 = inlined_call_operand.vmem [shape: bf16[32,32], index: 3, kind: output, shape index: {}]
  %s4 = sld [smem:[#allocation0]]
  $region22: #{sonic_cnn_forward.3} parent=0
    _
  %s6 = ssub.s32 1, %s4
  %s7 = scalar_select 0, %s6, %s4
  // Predicated region
  $region2: #{sonic_cnn_forward.3} parent=0 // pred_check
    _
  $region3: #{sonic_cnn_forward.3} parent=0 // pred_check_branch
    %9 = sbr.rel (0) target = $region5
  $region4: #{sonic_cnn_forward.3} parent=0 // pred_region
    _
  $region5: #{sonic_cnn_forward.3} parent=0 // pred_fallthru
    _
  // Predicated region
  $region6: #{sonic_cnn_forward.3} parent=0 // pred_check
    _
  $region7: #{sonic_cnn_forward.3} parent=0 // pred_check_branch
    %11 = sbr.rel (0) target = $region9
  $region8: #{sonic_cnn_forward.3} parent=0 // pred_region
    _
  $region9: #{sonic_cnn_forward.3} parent=0 // pred_fallthru
    _
  // Predicated region
  $region10: #{sonic_cnn_forward.3} parent=0 // pred_check
    _
  $region11: #{sonic_cnn_forward.3} parent=0 // pred_check_branch
    %13 = sbr.rel (0) target = $region13
  $region12: #{sonic_cnn_forward.3} parent=0 // pred_region
    _
  $region13: #{sonic_cnn_forward.3} parent=0 // pred_fallthru
    _
  %v15 = vld [vmem:[%s0] sm:$0xff]
  %v16 = vld [vmem:[%s0 + $0x8] sm:$0xf]
  %v17 = vld [vmem:[%s0 + $0xc] sm:$0xff]
  %v18 = vld [vmem:[%s0 + $0x14] sm:$0xf]
  %v19 = vld [vmem:[%s0 + $0x18] sm:$0xff]
  %v20 = vld [vmem:[%s0 + $0x20] sm:$0xf]
  %v21 = vld [vmem:[%s0 + $0x24] sm:$0xff]
  %v22 = vld [vmem:[%s0 + $0x2c] sm:$0xf]
  %v23 = vld [vmem:[%s1] sm:$0xf]
  %v24 = vld [vmem:[%s1 + $0x4] sm:$0xf]
  %v25 = vld [vmem:[%s1 + $0x8] sm:$0xf]
  %v26 = vld [vmem:[%s1 + $0xc] sm:$0xf]
  %v27 = vld [vmem:[%s1 + $0x10] sm:$0xf]
  %v28 = vld [vmem:[%s1 + $0x14] sm:$0xf]
  %v29 = vld [vmem:[%s1 + $0x18] sm:$0xf]
  %v30 = vld [vmem:[%s1 + $0x1c] sm:$0xf]
  %v31 = vld [vmem:[%s1 + $0x20] sm:$0xf]
  %v32 = vld [vmem:[%s1 + $0x24] sm:$0xf]
  %v33 = vld [vmem:[%s1 + $0x28] sm:$0xf]
  %v34 = vld [vmem:[%s1 + $0x2c] sm:$0xf]
  %v35 = vld [vmem:[%s1 + $0x30] sm:$0xf]
  %v36 = vld [vmem:[%s1 + $0x34] sm:$0xf]
  %v37 = vld [vmem:[%s1 + $0x38] sm:$0xf]
  %v38 = vld [vmem:[%s1 + $0x3c] sm:$0xf]
  %v39 = vld [vmem:[%s1 + $0x40] sm:$0xf]
  %v40 = vld [vmem:[%s1 + $0x44] sm:$0xf]
  %v41 = vld [vmem:[%s1 + $0x48] sm:$0xf]
  %v42 = vld [vmem:[%s1 + $0x4c] sm:$0xf]
  %v43 = vld [vmem:[%s1 + $0x50] sm:$0xf]
  %v44 = vld [vmem:[%s1 + $0x54] sm:$0xf]
  %v45 = vld [vmem:[%s1 + $0x58] sm:$0xf]
  %v46 = vld [vmem:[%s1 + $0x5c] sm:$0xf]
  %v47 = vld [vmem:[%s1 + $0x60] sm:$0xf]
  %v48 = vld [vmem:[%s1 + $0x64] sm:$0xf]
  %v49 = vld [vmem:[%s1 + $0x68] sm:$0xf]
  %v50 = vld [vmem:[%s1 + $0x6c] sm:$0xf]
  %v51 = vld [vmem:[%s1 + $0x70] sm:$0xf]
  %v52 = vld [vmem:[%s1 + $0x74] sm:$0xf]
  %v53 = vld [vmem:[%s1 + $0x78] sm:$0xf]
  %v54 = vld [vmem:[%s1 + $0x7c] sm:$0xf]
  %v55 = vld [vmem:[%s1 + $0x80] sm:$0xf]
  %v56 = vld [vmem:[%s1 + $0x84] sm:$0xf]
  %v57 = vld [vmem:[%s1 + $0x88] sm:$0xf]
  %v58 = vld [vmem:[%s1 + $0x8c] sm:$0xf]
  %v59 = vld [vmem:[%s1 + $0x90] sm:$0xf]
  %v60 = vld [vmem:[%s1 + $0x94] sm:$0xf]
  %v61 = vld [vmem:[%s1 + $0x98] sm:$0xf]
  %v62 = vld [vmem:[%s1 + $0x9c] sm:$0xf]
  %v63 = vld [vmem:[%s1 + $0xa0] sm:$0x3]
  %v64 = vld [vmem:[%s2] sm:$0x1]
  %v66 = vlaneseq
  %v67 = vshrl.u32 %v66, 7
  %v68 = vsub.s32 0, %v67
  %v69 = vrot.slane %v64, %v68
  %v79 = vunpack.c.l.b16 %v15
  %v80 = vunpack.c.h.b16 %v15
  %v81 = vunpack.c.l.b16 %v16
  %v82 = vunpack.c.l.b16 %v17
  %v83 = vunpack.c.h.b16 %v17
  %v84 = vunpack.c.l.b16 %v18
  %v85 = vunpack.c.l.b16 %v19
  %v86 = vunpack.c.h.b16 %v19
  %v87 = vunpack.c.l.b16 %v20
  %v88 = vunpack.c.l.b16 %v21
  %v89 = vunpack.c.h.b16 %v21
  %v90 = vunpack.c.l.b16 %v22
  %v91 = vpack.c.b16 %v82, %v79
  %v92 = vpack.c.b16 %v83, %v80
  %v93 = vpack.c.b16 %v84, %v81
  %v94 = vpack.c.b16 %v88, %v85
  %v95 = vpack.c.b16 %v89, %v86
  %v96 = vpack.c.b16 %v90, %v87
  %v142 = vunpack.c.l.b16 %v23
  %v143 = vunpack.c.l.b16 %v24
  %v144 = vunpack.c.l.b16 %v25
  %v145 = vunpack.c.l.b16 %v26
  %v146 = vunpack.c.l.b16 %v27
  %v147 = vunpack.c.l.b16 %v28
  %v148 = vunpack.c.l.b16 %v29
  %v149 = vunpack.c.l.b16 %v30
  %v150 = vunpack.c.l.b16 %v31
  %v151 = vunpack.c.l.b16 %v32
  %v152 = vunpack.c.l.b16 %v33
  %v153 = vunpack.c.l.b16 %v34
  %v154 = vunpack.c.l.b16 %v35
  %v155 = vunpack.c.l.b16 %v36
  %v156 = vunpack.c.l.b16 %v37
  %v157 = vunpack.c.l.b16 %v38
  %v158 = vunpack.c.l.b16 %v39
  %v159 = vunpack.c.l.b16 %v40
  %v160 = vunpack.c.l.b16 %v41
  %v161 = vunpack.c.l.b16 %v42
  %v162 = vunpack.c.l.b16 %v43
  %v163 = vunpack.c.l.b16 %v44
  %v164 = vunpack.c.l.b16 %v45
  %v165 = vunpack.c.l.b16 %v46
  %v166 = vunpack.c.l.b16 %v47
  %v167 = vunpack.c.l.b16 %v48
  %v168 = vunpack.c.l.b16 %v49
  %v169 = vunpack.c.l.b16 %v50
  %v170 = vunpack.c.l.b16 %v51
  %v171 = vunpack.c.l.b16 %v52
  %v172 = vunpack.c.l.b16 %v53
  %v173 = vunpack.c.l.b16 %v54
  %v174 = vunpack.c.l.b16 %v55
  %v175 = vunpack.c.l.b16 %v56
  %v176 = vunpack.c.l.b16 %v57
  %v177 = vunpack.c.l.b16 %v58
  %v178 = vunpack.c.l.b16 %v59
  %v179 = vunpack.c.l.b16 %v60
  %v180 = vunpack.c.l.b16 %v61
  %v181 = vunpack.c.l.b16 %v62
  %v182 = vunpack.c.l.b16 %v63
  %v183 = vpack.c.b16 %v143, %v142
  %v184 = vpack.c.b16 %v145, %v144
  %v185 = vpack.c.b16 %v147, %v146
  %v186 = vpack.c.b16 %v149, %v148
  %v187 = vpack.c.b16 %v151, %v150
  %v188 = vpack.c.b16 %v153, %v152
  %v189 = vpack.c.b16 %v155, %v154
  %v190 = vpack.c.b16 %v157, %v156
  %v191 = vpack.c.b16 %v159, %v158
  %v192 = vpack.c.b16 %v161, %v160
  %v193 = vpack.c.b16 %v163, %v162
  %v194 = vpack.c.b16 %v165, %v164
  %v195 = vpack.c.b16 %v167, %v166
  %v196 = vpack.c.b16 %v169, %v168
  %v197 = vpack.c.b16 %v171, %v170
  %v198 = vpack.c.b16 %v173, %v172
  %v199 = vpack.c.b16 %v175, %v174
  %v200 = vpack.c.b16 %v177, %v176
  %v201 = vpack.c.b16 %v179, %v178
  %v202 = vpack.c.b16 %v181, %v180
  %v203 = vpack.c.b16 %v182, %v182
  %vm224 = vcmask 556032
  %v226 = vsel %vm224, %v93, 0
  %v229 = vsel %vm224, %v96, 0
  %vm231 = vcmask 1041408
  %v233 = vsel %vm231, %v203, 0
  %235 = vmatprep.subr.bf16.mxu0 0
  %236 = vmatpush1.bf16.msra.mxu0 %v183
  %237 = vmatprep.subr.bf16.mxu0 0
  %238 = vmatpush1.bf16.msra.mxu0 %v184
  %239 = vmatprep.subr.bf16.mxu0 0
  %240 = vmatpush1.bf16.msra.mxu0 %v185
  %241 = vmatprep.subr.bf16.mxu0 0
  %242 = vmatpush1.bf16.msra.mxu0 %v186
  %243 = vmatprep.subr.bf16.mxu0 0
  %244 = vmatpush1.bf16.msra.mxu0 %v187
  %245 = vmatprep.subr.bf16.mxu0 0
  %246 = vmatpush1.bf16.msra.mxu0 %v188
  %247 = vmatprep.subr.bf16.mxu0 0
  %248 = vmatpush1.bf16.msra.mxu0 %v189
  %249 = vmatprep.subr.bf16.mxu0 0
  %250 = vmatpush1.bf16.msra.mxu0 %v190
  %251 = vmatprep.subr.bf16.mxu0 0
  %252 = vmatpush1.bf16.msra.mxu0 %v191
  %253 = vmatprep.subr.bf16.mxu0 0
  %254 = vmatpush1.bf16.msra.mxu0 %v192
  %255 = vmatprep.subr.bf16.mxu0 0
  %256 = vmatpush1.bf16.msra.mxu0 %v193
  %257 = vmatprep.subr.bf16.mxu0 0
  %258 = vmatpush1.bf16.msra.mxu0 %v194
  %259 = vmatprep.subr.bf16.mxu0 0
  %260 = vmatpush1.bf16.msra.mxu0 %v195
  %261 = vmatprep.subr.bf16.mxu0 0
  %262 = vmatpush1.bf16.msra.mxu0 %v196
  %263 = vmatprep.subr.bf16.mxu0 0
  %264 = vmatpush1.bf16.msra.mxu0 %v197
  %265 = vmatprep.subr.bf16.mxu0 0
  %266 = vmatpush1.bf16.msra.mxu0 %v198
  %267 = vmatprep.mubr.bf16.mxu0 %v92
  %268 = vmatmul.mubr.bf16.gmra.mrb[0].mxu0 %v91
  %v269 = vpop.f32.mrb[0].mxu0
  %v270 = vadd.f32 %v69, %v269
  %v271 = vpop.f32.mrb[0].mxu0
  %v272 = vpop.f32.mrb[0].mxu0
  %v273 = vadd.f32 %v69, %v272
  %v274 = vpop.f32.mrb[0].mxu0
  %275 = vmatprep.mubr.bf16.mxu0 %v95
  %276 = vmatmul.mubr.bf16.gmra.mrb[0].mxu0 %v94
  %v277 = vpop.f32.mrb[0].mxu0
  %v278 = vadd.f32 %v69, %v277
  %v279 = vpop.f32.mrb[0].mxu0
  %v280 = vpop.f32.mrb[0].mxu0
  %v281 = vadd.f32 %v69, %v280
  %v282 = vpop.f32.mrb[0].mxu0
  %283 = vdwg.mxu0
  %284 = vmatprep.subr.bf16.mxu0 0
  %285 = vmatpush1.bf16.msra.mxu0 %v199
  %286 = vmatprep.subr.bf16.mxu0 0
  %287 = vmatpush1.bf16.msra.mxu0 %v200
  %288 = vmatprep.subr.bf16.mxu0 0
  %289 = vmatpush1.bf16.msra.mxu0 %v201
  %290 = vmatprep.subr.bf16.mxu0 0
  %291 = vmatpush1.bf16.msra.mxu0 %v202
  %292 = vmatprep.subr.bf16.mxu0 0
  %293 = vmatpush1.bf16.msra.mxu0 %v233
  %294 = vmatprep.subr.bf16.mxu0 0
  %295 = vmatpush1.bf16.msra.mxu0 0
  %296 = vmatprep.subr.bf16.mxu0 0
  %297 = vmatpush1.bf16.msra.mxu0 0
  %298 = vmatprep.subr.bf16.mxu0 0
  %299 = vmatpush1.bf16.msra.mxu0 0
  %300 = vmatprep.subr.bf16.mxu0 0
  %301 = vmatpush1.bf16.msra.mxu0 0
  %302 = vmatprep.subr.bf16.mxu0 0
  %303 = vmatpush1.bf16.msra.mxu0 0
  %304 = vmatprep.subr.bf16.mxu0 0
  %305 = vmatpush1.bf16.msra.mxu0 0
  %306 = vmatprep.subr.bf16.mxu0 0
  %307 = vmatpush1.bf16.msra.mxu0 0
  %308 = vmatprep.subr.bf16.mxu0 0
  %309 = vmatpush1.bf16.msra.mxu0 0
  %310 = vmatprep.subr.bf16.mxu0 0
  %311 = vmatpush1.bf16.msra.mxu0 0
  %312 = vmatprep.subr.bf16.mxu0 0
  %313 = vmatpush1.bf16.msra.mxu0 0
  %314 = vmatprep.subr.bf16.mxu0 0
  %315 = vmatpush1.bf16.msra.mxu0 0
  %316 = vmatprep.mubr.bf16.mxu0 0
  %317 = vmatmul.mubr.bf16.gmra.mrb[0].mxu0 %v226
  %v318 = vpop.f32.mrb[0].mxu0
  %v319 = vadd.f32 %v270, %v318
  %v320 = vpop.f32.mrb[0].mxu0
  %v321 = vpop.f32.mrb[0].mxu0
  %v322 = vadd.f32 %v273, %v321
  %v323 = vpop.f32.mrb[0].mxu0
  %324 = vmatprep.mubr.bf16.mxu0 0
  %325 = vmatmul.mubr.bf16.gmra.mrb[0].mxu0 %v229
  %v326 = vpop.f32.mrb[0].mxu0
  %v327 = vadd.f32 %v278, %v326
  %v328 = vpop.f32.mrb[0].mxu0
  %v329 = vpop.f32.mrb[0].mxu0
  %v330 = vadd.f32 %v281, %v329
  %v331 = vpop.f32.mrb[0].mxu0
  %332 = vdwg.mxu0
  %v333 = vmax.f32 %v319, 0.0
  %v334 = vmax.f32 %v322, 0.0
  %v335 = vmax.f32 %v327, 0.0
  %v336 = vmax.f32 %v330, 0.0
  %v337 = vpack.c.bf16 %v334, %v333
  %v338 = vpack.c.bf16 %v336, %v335
  %v341 = vunpack.c.l.b16 %v337
  %v342 = vunpack.c.h.b16 %v337
  %v343 = vunpack.c.l.b16 %v338
  %v344 = vunpack.c.h.b16 %v338
  %v345 = vpack.c.b16 %v341, %v341
  %v346 = vpack.c.b16 %v342, %v342
  %v347 = vpack.c.b16 %v343, %v343
  %v348 = vpack.c.b16 %v344, %v344
  %vm353 = vcmask 257024
  %354 = vst.msk [vmem:[%s3] sm:$0xf] %vm353, %v345
  %355 = vst.msk [vmem:[%s3 + $0x4] sm:$0xf] %vm353, %v346
  %356 = vst.msk [vmem:[%s3 + $0x8] sm:$0xf] %vm353, %v347
  %357 = vst.msk [vmem:[%s3 + $0xc] sm:$0xf] %vm353, %v348
  // Predicated region
  $region14: #{sonic_cnn_forward.3} parent=0 // pred_check
    _
  $region15: #{sonic_cnn_forward.3} parent=0 // pred_check_branch
    %359 = sbr.rel (0) target = $region17
  $region16: #{sonic_cnn_forward.3} parent=0 // pred_region
    _
  $region17: #{sonic_cnn_forward.3} parent=0 // pred_fallthru
    _
  // Predicated region
  $region18: #{sonic_cnn_forward.3} parent=0 // pred_check
    _
  $region19: #{sonic_cnn_forward.3} parent=0 // pred_check_branch
    %361 = sbr.rel (0) target = $region21
  $region20: #{sonic_cnn_forward.3} parent=0 // pred_region
    _
  $region21: #{sonic_cnn_forward.3} parent=0 // pred_fallthru
    _

// kernel: sonic_cnn_forward.4
$region0: #{sonic_cnn_forward.4}
  #allocation0 [shape = 'u32[]', space=smem, size = 0x4, offset = 0x4, fixed_abs, tag = 'smem constant byte address 0x4 - core index']
  #allocation1 [shape = 'u32[144,128]{1,0:T(1,128)}', space=vmem, size = 0x12000, scoped, tag = 'internal scratch']
  %s0 = inlined_call_operand.vmem [shape: bf16[8,800], index: 0, kind: input, shape index: {}]
  %s1 = inlined_call_operand.vmem [shape: bf16[800,64], index: 1, kind: input, shape index: {}]
  %s2 = inlined_call_operand.vmem [shape: f32[1,64], index: 2, kind: input, shape index: {}]
  %s3 = inlined_call_operand.vmem [shape: bf16[8,64], index: 3, kind: output, shape index: {}]
  %s4 = sld [smem:[#allocation0]]
  $region22: #{sonic_cnn_forward.4} parent=0
    _
  %s6 = ssub.s32 1, %s4
  %s7 = scalar_select 0, %s6, %s4
  // Predicated region
  $region2: #{sonic_cnn_forward.4} parent=0 // pred_check
    _
  $region3: #{sonic_cnn_forward.4} parent=0 // pred_check_branch
    %9 = sbr.rel (0) target = $region5
  $region4: #{sonic_cnn_forward.4} parent=0 // pred_region
    _
  $region5: #{sonic_cnn_forward.4} parent=0 // pred_fallthru
    _
  // Predicated region
  $region6: #{sonic_cnn_forward.4} parent=0 // pred_check
    _
  $region7: #{sonic_cnn_forward.4} parent=0 // pred_check_branch
    %11 = sbr.rel (0) target = $region9
  $region8: #{sonic_cnn_forward.4} parent=0 // pred_region
    _
  $region9: #{sonic_cnn_forward.4} parent=0 // pred_fallthru
    _
  // Predicated region
  $region10: #{sonic_cnn_forward.4} parent=0 // pred_check
    _
  $region11: #{sonic_cnn_forward.4} parent=0 // pred_check_branch
    %13 = sbr.rel (0) target = $region13
  $region12: #{sonic_cnn_forward.4} parent=0 // pred_region
    _
  $region13: #{sonic_cnn_forward.4} parent=0 // pred_fallthru
    _
  %v15 = vld [vmem:[%s0] sm:$0xff]
  %v16 = vld [vmem:[%s0 + $0x8] sm:$0xff]
  %v17 = vld [vmem:[%s0 + $0x10] sm:$0xff]
  %v18 = vld [vmem:[%s0 + $0x18] sm:$0xf]
  %v19 = vld [vmem:[%s1] sm:$0xf]
  %v20 = vld [vmem:[%s1 + $0x4] sm:$0xf]
  %v21 = vld [vmem:[%s1 + $0x8] sm:$0xf]
  %v22 = vld [vmem:[%s1 + $0xc] sm:$0xf]
  %v23 = vld [vmem:[%s1 + $0x10] sm:$0xf]
  %v24 = vld [vmem:[%s1 + $0x14] sm:$0xf]
  %v25 = vld [vmem:[%s1 + $0x18] sm:$0xf]
  %v26 = vld [vmem:[%s1 + $0x1c] sm:$0xf]
  %v27 = vld [vmem:[%s1 + $0x20] sm:$0xf]
  %v28 = vld [vmem:[%s1 + $0x24] sm:$0xf]
  %v29 = vld [vmem:[%s1 + $0x28] sm:$0xf]
  %v30 = vld [vmem:[%s1 + $0x2c] sm:$0xf]
  %v31 = vld [vmem:[%s1 + $0x30] sm:$0xf]
  %v32 = vld [vmem:[%s1 + $0x34] sm:$0xf]
  %v33 = vld [vmem:[%s1 + $0x38] sm:$0xf]
  %v34 = vld [vmem:[%s1 + $0x3c] sm:$0xf]
  %v35 = vld [vmem:[%s1 + $0x40] sm:$0xf]
  %v36 = vld [vmem:[%s1 + $0x44] sm:$0xf]
  %v37 = vld [vmem:[%s1 + $0x48] sm:$0xf]
  %v38 = vld [vmem:[%s1 + $0x4c] sm:$0xf]
  %v39 = vld [vmem:[%s1 + $0x50] sm:$0xf]
  %v40 = vld [vmem:[%s1 + $0x54] sm:$0xf]
  %v41 = vld [vmem:[%s1 + $0x58] sm:$0xf]
  %v42 = vld [vmem:[%s1 + $0x5c] sm:$0xf]
  %v43 = vld [vmem:[%s1 + $0x60] sm:$0xf]
  %v44 = vld [vmem:[%s1 + $0x64] sm:$0xf]
  %v45 = vld [vmem:[%s1 + $0x68] sm:$0xf]
  %v46 = vld [vmem:[%s1 + $0x6c] sm:$0xf]
  %v47 = vld [vmem:[%s1 + $0x70] sm:$0xf]
  %v48 = vld [vmem:[%s1 + $0x74] sm:$0xf]
  %v49 = vld [vmem:[%s1 + $0x78] sm:$0xf]
  %v50 = vld [vmem:[%s1 + $0x7c] sm:$0xf]
  %v51 = vld [vmem:[%s1 + $0x80] sm:$0xf]
  %v52 = vld [vmem:[%s1 + $0x84] sm:$0xf]
  %v53 = vld [vmem:[%s1 + $0x88] sm:$0xf]
  %v54 = vld [vmem:[%s1 + $0x8c] sm:$0xf]
  %v55 = vld [vmem:[%s1 + $0x90] sm:$0xf]
  %v56 = vld [vmem:[%s1 + $0x94] sm:$0xf]
  %v57 = vld [vmem:[%s1 + $0x98] sm:$0xf]
  %v58 = vld [vmem:[%s1 + $0x9c] sm:$0xf]
  %v59 = vld [vmem:[%s1 + $0xa0] sm:$0xf]
  %v60 = vld [vmem:[%s1 + $0xa4] sm:$0xf]
  %v61 = vld [vmem:[%s1 + $0xa8] sm:$0xf]
  %v62 = vld [vmem:[%s1 + $0xac] sm:$0xf]
  %v63 = vld [vmem:[%s1 + $0xb0] sm:$0xf]
  %v64 = vld [vmem:[%s1 + $0xb4] sm:$0xf]
  %v65 = vld [vmem:[%s1 + $0xb8] sm:$0xf]
  %v66 = vld [vmem:[%s1 + $0xbc] sm:$0xf]
  %v67 = vld [vmem:[%s1 + $0xc0] sm:$0xf]
  %v68 = vld [vmem:[%s1 + $0xc4] sm:$0xf]
  %v69 = vld [vmem:[%s1 + $0xc8] sm:$0xf]
  %v70 = vld [vmem:[%s1 + $0xcc] sm:$0xf]
  %v71 = vld [vmem:[%s1 + $0xd0] sm:$0xf]
  %v72 = vld [vmem:[%s1 + $0xd4] sm:$0xf]
  %v73 = vld [vmem:[%s1 + $0xd8] sm:$0xf]
  %v74 = vld [vmem:[%s1 + $0xdc] sm:$0xf]
  %v75 = vld [vmem:[%s1 + $0xe0] sm:$0xf]
  %v76 = vld [vmem:[%s1 + $0xe4] sm:$0xf]
  %v77 = vld [vmem:[%s1 + $0xe8] sm:$0xf]
  %v78 = vld [vmem:[%s1 + $0xec] sm:$0xf]
  %v79 = vld [vmem:[%s1 + $0xf0] sm:$0xf]
  %v80 = vld [vmem:[%s1 + $0xf4] sm:$0xf]
  %v81 = vld [vmem:[%s1 + $0xf8] sm:$0xf]
  %v82 = vld [vmem:[%s1 + $0xfc] sm:$0xf]
  %v83 = vld [vmem:[%s1 + $0x100] sm:$0xf]
  %v84 = vld [vmem:[%s1 + $0x104] sm:$0xf]
  %v85 = vld [vmem:[%s1 + $0x108] sm:$0xf]
  %v86 = vld [vmem:[%s1 + $0x10c] sm:$0xf]
  %v87 = vld [vmem:[%s1 + $0x110] sm:$0xf]
  %v88 = vld [vmem:[%s1 + $0x114] sm:$0xf]
  %v89 = vld [vmem:[%s1 + $0x118] sm:$0xf]
  %v90 = vld [vmem:[%s1 + $0x11c] sm:$0xf]
  %v91 = vld [vmem:[%s1 + $0x120] sm:$0xf]
  %v92 = vld [vmem:[%s1 + $0x124] sm:$0xf]
  %v93 = vld [vmem:[%s1 + $0x128] sm:$0xf]
  %v94 = vld [vmem:[%s1 + $0x12c] sm:$0xf]
  %v95 = vld [vmem:[%s1 + $0x130] sm:$0xf]
  %v96 = vld [vmem:[%s1 + $0x134] sm:$0xf]
  %v97 = vld [vmem:[%s1 + $0x138] sm:$0xf]
  %v98 = vld [vmem:[%s1 + $0x13c] sm:$0xf]
  %v99 = vld [vmem:[%s1 + $0x140] sm:$0xf]
  %v100 = vld [vmem:[%s1 + $0x144] sm:$0xf]
  %v101 = vld [vmem:[%s1 + $0x148] sm:$0xf]
  %v102 = vld [vmem:[%s1 + $0x14c] sm:$0xf]
  %v103 = vld [vmem:[%s1 + $0x150] sm:$0xf]
  %v104 = vld [vmem:[%s1 + $0x154] sm:$0xf]
  %v105 = vld [vmem:[%s1 + $0x158] sm:$0xf]
  %v106 = vld [vmem:[%s1 + $0x15c] sm:$0xf]
  %v107 = vld [vmem:[%s1 + $0x160] sm:$0xf]
  %v108 = vld [vmem:[%s1 + $0x164] sm:$0xf]
  %v109 = vld [vmem:[%s1 + $0x168] sm:$0xf]
  %v110 = vld [vmem:[%s1 + $0x16c] sm:$0xf]
  %v111 = vld [vmem:[%s1 + $0x170] sm:$0xf]
  %v112 = vld [vmem:[%s1 + $0x174] sm:$0xf]
  %v113 = vld [vmem:[%s1 + $0x178] sm:$0xf]
  %v114 = vld [vmem:[%s1 + $0x17c] sm:$0xf]
  %v115 = vld [vmem:[%s1 + $0x180] sm:$0xf]
  %v116 = vld [vmem:[%s1 + $0x184] sm:$0xf]
  %v117 = vld [vmem:[%s1 + $0x188] sm:$0xf]
  %v118 = vld [vmem:[%s1 + $0x18c] sm:$0xf]
  %v119 = vld [vmem:[%s2] sm:$0x1]
  %v121 = vlaneseq
  %v122 = vshrl.u32 %v121, 7
  %v123 = vsub.s32 0, %v122
  %v124 = vrot.slane %v119, %v123
  %v130 = vunpack.c.l.b16 %v15
  %v131 = vunpack.c.h.b16 %v15
  %v132 = vunpack.c.l.b16 %v16
  %v133 = vunpack.c.h.b16 %v16
  %v134 = vunpack.c.l.b16 %v17
  %v135 = vunpack.c.h.b16 %v17
  %v136 = vunpack.c.l.b16 %v18
  %v137 = vpack.c.b16 %v130, %v130
  %v138 = vpack.c.b16 %v131, %v131
  %v139 = vpack.c.b16 %v132, %v132
  %v140 = vpack.c.b16 %v133, %v133
  %v141 = vpack.c.b16 %v134, %v134
  %v142 = vpack.c.b16 %v135, %v135
  %v143 = vpack.c.b16 %v136, %v136
  %v250 = vunpack.c.l.b16 %v19
  %v251 = vunpack.c.l.b16 %v20
  %v252 = vunpack.c.l.b16 %v21
  %v253 = vunpack.c.l.b16 %v22
  %v254 = vunpack.c.l.b16 %v23
  %v255 = vunpack.c.l.b16 %v24
  %v256 = vunpack.c.l.b16 %v25
  %v257 = vunpack.c.l.b16 %v26
  %v258 = vunpack.c.l.b16 %v27
  %v259 = vunpack.c.l.b16 %v28
  %v260 = vunpack.c.l.b16 %v29
  %v261 = vunpack.c.l.b16 %v30
  %v262 = vunpack.c.l.b16 %v31
  %v263 = vunpack.c.l.b16 %v32
  %v264 = vunpack.c.l.b16 %v33
  %v265 = vunpack.c.l.b16 %v34
  %v266 = vunpack.c.l.b16 %v35
  %v267 = vunpack.c.l.b16 %v36
  %v268 = vunpack.c.l.b16 %v37
  %v269 = vunpack.c.l.b16 %v38
  %v270 = vunpack.c.l.b16 %v39
  %v271 = vunpack.c.l.b16 %v40
  %v272 = vunpack.c.l.b16 %v41
  %v273 = vunpack.c.l.b16 %v42
  %v274 = vunpack.c.l.b16 %v43
  %v275 = vunpack.c.l.b16 %v44
  %v276 = vunpack.c.l.b16 %v45
  %v277 = vunpack.c.l.b16 %v46
  %v278 = vunpack.c.l.b16 %v47
  %v279 = vunpack.c.l.b16 %v48
  %v280 = vunpack.c.l.b16 %v49
  %v281 = vunpack.c.l.b16 %v50
  %v282 = vunpack.c.l.b16 %v51
  %v283 = vunpack.c.l.b16 %v52
  %v284 = vunpack.c.l.b16 %v53
  %v285 = vunpack.c.l.b16 %v54
  %v286 = vunpack.c.l.b16 %v55
  %v287 = vunpack.c.l.b16 %v56
  %v288 = vunpack.c.l.b16 %v57
  %v289 = vunpack.c.l.b16 %v58
  %v290 = vunpack.c.l.b16 %v59
  %v291 = vunpack.c.l.b16 %v60
  %v292 = vunpack.c.l.b16 %v61
  %v293 = vunpack.c.l.b16 %v62
  %v294 = vunpack.c.l.b16 %v63
  %v295 = vunpack.c.l.b16 %v64
  %v296 = vunpack.c.l.b16 %v65
  %v297 = vunpack.c.l.b16 %v66
  %v298 = vunpack.c.l.b16 %v67
  %v299 = vunpack.c.l.b16 %v68
  %v300 = vunpack.c.l.b16 %v69
  %v301 = vunpack.c.l.b16 %v70
  %v302 = vunpack.c.l.b16 %v71
  %v303 = vunpack.c.l.b16 %v72
  %v304 = vunpack.c.l.b16 %v73
  %v305 = vunpack.c.l.b16 %v74
  %v306 = vunpack.c.l.b16 %v75
  %v307 = vunpack.c.l.b16 %v76
  %v308 = vunpack.c.l.b16 %v77
  %v309 = vunpack.c.l.b16 %v78
  %v310 = vunpack.c.l.b16 %v79
  %v311 = vunpack.c.l.b16 %v80
  %v312 = vunpack.c.l.b16 %v81
  %v313 = vunpack.c.l.b16 %v82
  %v314 = vunpack.c.l.b16 %v83
  %v315 = vunpack.c.l.b16 %v84
  %v316 = vunpack.c.l.b16 %v85
  %v317 = vunpack.c.l.b16 %v86
  %v318 = vunpack.c.l.b16 %v87
  %v319 = vunpack.c.l.b16 %v88
  %v320 = vunpack.c.l.b16 %v89
  %v321 = vunpack.c.l.b16 %v90
  %v322 = vunpack.c.l.b16 %v91
  %v323 = vunpack.c.l.b16 %v92
  %v324 = vunpack.c.l.b16 %v93
  %v325 = vunpack.c.l.b16 %v94
  %v326 = vunpack.c.l.b16 %v95
  %v327 = vunpack.c.l.b16 %v96
  %v328 = vunpack.c.l.b16 %v97
  %v329 = vunpack.c.l.b16 %v98
  %v330 = vunpack.c.l.b16 %v99
  %v331 = vunpack.c.l.b16 %v100
  %v332 = vunpack.c.l.b16 %v101
  %v333 = vunpack.c.l.b16 %v102
  %v334 = vunpack.c.l.b16 %v103
  %v335 = vunpack.c.l.b16 %v104
  %v336 = vunpack.c.l.b16 %v105
  %v337 = vunpack.c.l.b16 %v106
  %v338 = vunpack.c.l.b16 %v107
  %v339 = vunpack.c.l.b16 %v108
  %v340 = vunpack.c.l.b16 %v109
  %v341 = vunpack.c.l.b16 %v110
  %v342 = vunpack.c.l.b16 %v111
  %v343 = vunpack.c.l.b16 %v112
  %v344 = vunpack.c.l.b16 %v113
  %v345 = vunpack.c.l.b16 %v114
  %v346 = vunpack.c.l.b16 %v115
  %v347 = vunpack.c.l.b16 %v116
  %v348 = vunpack.c.l.b16 %v117
  %v349 = vunpack.c.l.b16 %v118
  %v350 = vpack.c.b16 %v251, %v250
  %v351 = vpack.c.b16 %v253, %v252
  %v352 = vpack.c.b16 %v255, %v254
  %v353 = vpack.c.b16 %v257, %v256
  %v354 = vpack.c.b16 %v259, %v258
  %v355 = vpack.c.b16 %v261, %v260
  %v356 = vpack.c.b16 %v263, %v262
  %v357 = vpack.c.b16 %v265, %v264
  %v358 = vpack.c.b16 %v267, %v266
  %v359 = vpack.c.b16 %v269, %v268
  %v360 = vpack.c.b16 %v271, %v270
  %v361 = vpack.c.b16 %v273, %v272
  %v362 = vpack.c.b16 %v275, %v274
  %v363 = vpack.c.b16 %v277, %v276
  %v364 = vpack.c.b16 %v279, %v278
  %v365 = vpack.c.b16 %v281, %v280
  %v366 = vpack.c.b16 %v283, %v282
  %v367 = vpack.c.b16 %v285, %v284
  %v368 = vpack.c.b16 %v287, %v286
  %v369 = vpack.c.b16 %v289, %v288
  %v370 = vpack.c.b16 %v291, %v290
  %v371 = vpack.c.b16 %v293, %v292
  %v372 = vpack.c.b16 %v295, %v294
  %v373 = vpack.c.b16 %v297, %v296
  %v374 = vpack.c.b16 %v299, %v298
  %v375 = vpack.c.b16 %v301, %v300
  %v376 = vpack.c.b16 %v303, %v302
  %v377 = vpack.c.b16 %v305, %v304
  %v378 = vpack.c.b16 %v307, %v306
  %v379 = vpack.c.b16 %v309, %v308
  %v380 = vpack.c.b16 %v311, %v310
  %v381 = vpack.c.b16 %v313, %v312
  %v382 = vpack.c.b16 %v315, %v314
  %v383 = vpack.c.b16 %v317, %v316
  %v384 = vpack.c.b16 %v319, %v318
  %v385 = vpack.c.b16 %v321, %v320
  %v386 = vpack.c.b16 %v323, %v322
  %v387 = vpack.c.b16 %v325, %v324
  %v388 = vpack.c.b16 %v327, %v326
  %v389 = vpack.c.b16 %v329, %v328
  %v390 = vpack.c.b16 %v331, %v330
  %v391 = vpack.c.b16 %v333, %v332
  %v392 = vpack.c.b16 %v335, %v334
  %v393 = vpack.c.b16 %v337, %v336
  %v394 = vpack.c.b16 %v339, %v338
  %v395 = vpack.c.b16 %v341, %v340
  %v396 = vpack.c.b16 %v343, %v342
  %v397 = vpack.c.b16 %v345, %v344
  %v398 = vpack.c.b16 %v347, %v346
  %v399 = vpack.c.b16 %v349, %v348
  %vm450 = vcmask 261120
  %v452 = vsel %vm450, %v143, 0
  %454 = vmatprep.subr.bf16.mxu0 0
  %455 = vmatpush1.bf16.msra.mxu0 %v350
  %456 = vmatprep.subr.bf16.mxu0 0
  %457 = vmatpush1.bf16.msra.mxu0 %v351
  %458 = vmatprep.subr.bf16.mxu0 0
  %459 = vmatpush1.bf16.msra.mxu0 %v352
  %460 = vmatprep.subr.bf16.mxu0 0
  %461 = vmatpush1.bf16.msra.mxu0 %v353
  %462 = vmatprep.subr.bf16.mxu0 0
  %463 = vmatpush1.bf16.msra.mxu0 %v354
  %464 = vmatprep.subr.bf16.mxu0 0
  %465 = vmatpush1.bf16.msra.mxu0 %v355
  %466 = vmatprep.subr.bf16.mxu0 0
  %467 = vmatpush1.bf16.msra.mxu0 %v356
  %468 = vmatprep.subr.bf16.mxu0 0
  %469 = vmatpush1.bf16.msra.mxu0 %v357
  %470 = vmatprep.subr.bf16.mxu0 0
  %471 = vmatpush1.bf16.msra.mxu0 %v358
  %472 = vmatprep.subr.bf16.mxu0 0
  %473 = vmatpush1.bf16.msra.mxu0 %v359
  %474 = vmatprep.subr.bf16.mxu0 0
  %475 = vmatpush1.bf16.msra.mxu0 %v360
  %476 = vmatprep.subr.bf16.mxu0 0
  %477 = vmatpush1.bf16.msra.mxu0 %v361
  %478 = vmatprep.subr.bf16.mxu0 0
  %479 = vmatpush1.bf16.msra.mxu0 %v362
  %480 = vmatprep.subr.bf16.mxu0 0
  %481 = vmatpush1.bf16.msra.mxu0 %v363
  %482 = vmatprep.subr.bf16.mxu0 0
  %483 = vmatpush1.bf16.msra.mxu0 %v364
  %484 = vmatprep.subr.bf16.mxu0 0
  %485 = vmatpush1.bf16.msra.mxu0 %v365
  %486 = vmatprep.mubr.bf16.mxu0 %v138
  %487 = vmatmul.mubr.bf16.gmra.mrb[0].mxu0 %v137
  %v488 = vpop.f32.mrb[0].mxu0
  %v489 = vadd.f32 %v124, %v488
  %v490 = vpop.f32.mrb[0].mxu0
  %v491 = vpop.f32.mrb[0].mxu0
  %v492 = vpop.f32.mrb[0].mxu0
  %493 = vdwg.mxu0
  %494 = vmatprep.subr.bf16.mxu0 0
  %495 = vmatpush1.bf16.msra.mxu0 %v366
  %496 = vmatprep.subr.bf16.mxu0 0
  %497 = vmatpush1.bf16.msra.mxu0 %v367
  %498 = vmatprep.subr.bf16.mxu0 0
  %499 = vmatpush1.bf16.msra.mxu0 %v368
  %500 = vmatprep.subr.bf16.mxu0 0
  %501 = vmatpush1.bf16.msra.mxu0 %v369
  %502 = vmatprep.subr.bf16.mxu0 0
  %503 = vmatpush1.bf16.msra.mxu0 %v370
  %504 = vmatprep.subr.bf16.mxu0 0
  %505 = vmatpush1.bf16.msra.mxu0 %v371
  %506 = vmatprep.subr.bf16.mxu0 0
  %507 = vmatpush1.bf16.msra.mxu0 %v372
  %508 = vmatprep.subr.bf16.mxu0 0
  %509 = vmatpush1.bf16.msra.mxu0 %v373
  %510 = vmatprep.subr.bf16.mxu0 0
  %511 = vmatpush1.bf16.msra.mxu0 %v374
  %512 = vmatprep.subr.bf16.mxu0 0
  %513 = vmatpush1.bf16.msra.mxu0 %v375
  %514 = vmatprep.subr.bf16.mxu0 0
  %515 = vmatpush1.bf16.msra.mxu0 %v376
  %516 = vmatprep.subr.bf16.mxu0 0
  %517 = vmatpush1.bf16.msra.mxu0 %v377
  %518 = vmatprep.subr.bf16.mxu0 0
  %519 = vmatpush1.bf16.msra.mxu0 %v378
  %520 = vmatprep.subr.bf16.mxu0 0
  %521 = vmatpush1.bf16.msra.mxu0 %v379
  %522 = vmatprep.subr.bf16.mxu0 0
  %523 = vmatpush1.bf16.msra.mxu0 %v380
  %524 = vmatprep.subr.bf16.mxu0 0
  %525 = vmatpush1.bf16.msra.mxu0 %v381
  %526 = vmatprep.mubr.bf16.mxu0 %v140
  %527 = vmatmul.mubr.bf16.gmra.mrb[0].mxu0 %v139
  %v528 = vpop.f32.mrb[0].mxu0
  %v529 = vadd.f32 %v489, %v528
  %v530 = vpop.f32.mrb[0].mxu0
  %v531 = vpop.f32.mrb[0].mxu0
  %v532 = vpop.f32.mrb[0].mxu0
  %533 = vdwg.mxu0
  %534 = vmatprep.subr.bf16.mxu0 0
  %535 = vmatpush1.bf16.msra.mxu0 %v382
  %536 = vmatprep.subr.bf16.mxu0 0
  %537 = vmatpush1.bf16.msra.mxu0 %v383
  %538 = vmatprep.subr.bf16.mxu0 0
  %539 = vmatpush1.bf16.msra.mxu0 %v384
  %540 = vmatprep.subr.bf16.mxu0 0
  %541 = vmatpush1.bf16.msra.mxu0 %v385
  %542 = vmatprep.subr.bf16.mxu0 0
  %543 = vmatpush1.bf16.msra.mxu0 %v386
  %544 = vmatprep.subr.bf16.mxu0 0
  %545 = vmatpush1.bf16.msra.mxu0 %v387
  %546 = vmatprep.subr.bf16.mxu0 0
  %547 = vmatpush1.bf16.msra.mxu0 %v388
  %548 = vmatprep.subr.bf16.mxu0 0
  %549 = vmatpush1.bf16.msra.mxu0 %v389
  %550 = vmatprep.subr.bf16.mxu0 0
  %551 = vmatpush1.bf16.msra.mxu0 %v390
  %552 = vmatprep.subr.bf16.mxu0 0
  %553 = vmatpush1.bf16.msra.mxu0 %v391
  %554 = vmatprep.subr.bf16.mxu0 0
  %555 = vmatpush1.bf16.msra.mxu0 %v392
  %556 = vmatprep.subr.bf16.mxu0 0
  %557 = vmatpush1.bf16.msra.mxu0 %v393
  %558 = vmatprep.subr.bf16.mxu0 0
  %559 = vmatpush1.bf16.msra.mxu0 %v394
  %560 = vmatprep.subr.bf16.mxu0 0
  %561 = vmatpush1.bf16.msra.mxu0 %v395
  %562 = vmatprep.subr.bf16.mxu0 0
  %563 = vmatpush1.bf16.msra.mxu0 %v396
  %564 = vmatprep.subr.bf16.mxu0 0
  %565 = vmatpush1.bf16.msra.mxu0 %v397
  %566 = vmatprep.mubr.bf16.mxu0 %v142
  %567 = vmatmul.mubr.bf16.gmra.mrb[0].mxu0 %v141
  %v568 = vpop.f32.mrb[0].mxu0
  %v569 = vadd.f32 %v529, %v568
  %v570 = vpop.f32.mrb[0].mxu0
  %v571 = vpop.f32.mrb[0].mxu0
  %v572 = vpop.f32.mrb[0].mxu0
  %573 = vdwg.mxu0
  %574 = vmatprep.subr.bf16.mxu0 0
  %575 = vmatpush1.bf16.msra.mxu0 %v398
  %576 = vmatprep.subr.bf16.mxu0 0
  %577 = vmatpush1.bf16.msra.mxu0 %v399
  %578 = vmatprep.subr.bf16.mxu0 0
  %579 = vmatpush1.bf16.msra.mxu0 0
  %580 = vmatprep.subr.bf16.mxu0 0
  %581 = vmatpush1.bf16.msra.mxu0 0
  %582 = vmatprep.subr.bf16.mxu0 0
  %583 = vmatpush1.bf16.msra.mxu0 0
  %584 = vmatprep.subr.bf16.mxu0 0
  %585 = vmatpush1.bf16.msra.mxu0 0
  %586 = vmatprep.subr.bf16.mxu0 0
  %587 = vmatpush1.bf16.msra.mxu0 0
  %588 = vmatprep.subr.bf16.mxu0 0
  %589 = vmatpush1.bf16.msra.mxu0 0
  %590 = vmatprep.subr.bf16.mxu0 0
  %591 = vmatpush1.bf16.msra.mxu0 0
  %592 = vmatprep.subr.bf16.mxu0 0
  %593 = vmatpush1.bf16.msra.mxu0 0
  %594 = vmatprep.subr.bf16.mxu0 0
  %595 = vmatpush1.bf16.msra.mxu0 0
  %596 = vmatprep.subr.bf16.mxu0 0
  %597 = vmatpush1.bf16.msra.mxu0 0
  %598 = vmatprep.subr.bf16.mxu0 0
  %599 = vmatpush1.bf16.msra.mxu0 0
  %600 = vmatprep.subr.bf16.mxu0 0
  %601 = vmatpush1.bf16.msra.mxu0 0
  %602 = vmatprep.subr.bf16.mxu0 0
  %603 = vmatpush1.bf16.msra.mxu0 0
  %604 = vmatprep.subr.bf16.mxu0 0
  %605 = vmatpush1.bf16.msra.mxu0 0
  %606 = vmatprep.mubr.bf16.mxu0 0
  %607 = vmatmul.mubr.bf16.gmra.mrb[0].mxu0 %v452
  %v608 = vpop.f32.mrb[0].mxu0
  %v609 = vadd.f32 %v569, %v608
  %v610 = vpop.f32.mrb[0].mxu0
  %v611 = vpop.f32.mrb[0].mxu0
  %v612 = vpop.f32.mrb[0].mxu0
  %613 = vdwg.mxu0
  %v614 = vmax.f32 %v609, 0.0
  %v615 = vpack.c.bf16 %v614, %v614
  %vm616 = vcmask 519168
  %617 = vst.msk [vmem:[%s3] sm:$0xf] %vm616, %v615
  // Predicated region
  $region14: #{sonic_cnn_forward.4} parent=0 // pred_check
    _
  $region15: #{sonic_cnn_forward.4} parent=0 // pred_check_branch
    %619 = sbr.rel (0) target = $region17
  $region16: #{sonic_cnn_forward.4} parent=0 // pred_region
    _
  $region17: #{sonic_cnn_forward.4} parent=0 // pred_fallthru
    _
  // Predicated region
  $region18: #{sonic_cnn_forward.4} parent=0 // pred_check
    _
  $region19: #{sonic_cnn_forward.4} parent=0 // pred_check_branch
    %621 = sbr.rel (0) target = $region21
  $region20: #{sonic_cnn_forward.4} parent=0 // pred_region
    _
  $region21: #{sonic_cnn_forward.4} parent=0 // pred_fallthru
    _

// kernel: sonic_cnn_forward.5
$region0: #{sonic_cnn_forward.5}
  #allocation0 [shape = 'u32[]', space=smem, size = 0x4, offset = 0x4, fixed_abs, tag = 'smem constant byte address 0x4 - core index']
  #allocation1 [shape = 'u32[144,128]{1,0:T(1,128)}', space=vmem, size = 0x12000, scoped, tag = 'internal scratch']
  %s0 = inlined_call_operand.vmem [shape: bf16[8,576], index: 0, kind: input, shape index: {}]
  %s1 = inlined_call_operand.vmem [shape: bf16[576,64], index: 1, kind: input, shape index: {}]
  %s2 = inlined_call_operand.vmem [shape: f32[1,64], index: 2, kind: input, shape index: {}]
  %s3 = inlined_call_operand.vmem [shape: bf16[4,64,64], index: 3, kind: input, shape index: {}]
  %s4 = inlined_call_operand.vmem [shape: f32[1,64], index: 4, kind: input, shape index: {}]
  %s5 = inlined_call_operand.vmem [shape: bf16[64,8], index: 5, kind: input, shape index: {}]
  %s6 = inlined_call_operand.vmem [shape: f32[1,8], index: 6, kind: input, shape index: {}]
  %s7 = inlined_call_operand.hbm [shape: f32[2,8], index: 7, kind: output, shape index: {}]
  %s8 = sld [smem:[#allocation0]]
  $region38: #{sonic_cnn_forward.5} parent=0
    _
  %s10 = ssub.s32 1, %s8
  %s11 = scalar_select 0, %s10, %s8
  $region1: #{sonic_cnn_forward.5} parent=0
    #allocation2 [shape = 'u8[1024]{0}', space=vmem, size = 0x400, scoped, tag = 'output window, operand 0, single buffered']
    #allocation3 [shape = 's32[1]{0}', space=sflag, size = 0x4, scoped, tag = 'scoped memory for sonic_cnn_forward.5']
    %12 = vsyncpa [#allocation3], 0
    // Predicated region
    $region2: #{sonic_cnn_forward.5} parent=1 // pred_check
      _
    $region3: #{sonic_cnn_forward.5} parent=1 // pred_check_branch
      %14 = sbr.rel (0) target = $region5
    $region4: #{sonic_cnn_forward.5} parent=1 // pred_region
      _
    $region5: #{sonic_cnn_forward.5} parent=1 // pred_fallthru
      _
    // Predicated region
    $region6: #{sonic_cnn_forward.5} parent=1 // pred_check
      _
    $region7: #{sonic_cnn_forward.5} parent=1 // pred_check_branch
      %16 = sbr.rel (0) target = $region9
    $region8: #{sonic_cnn_forward.5} parent=1 // pred_region
      _
    $region9: #{sonic_cnn_forward.5} parent=1 // pred_fallthru
      _
    // Predicated region
    $region10: #{sonic_cnn_forward.5} parent=1 // pred_check
      _
    $region11: #{sonic_cnn_forward.5} parent=1 // pred_check_branch
      %18 = sbr.rel (0) target = $region13
    $region12: #{sonic_cnn_forward.5} parent=1 // pred_region
      _
    $region13: #{sonic_cnn_forward.5} parent=1 // pred_fallthru
      _
    // Predicated region
    $region14: #{sonic_cnn_forward.5} parent=1 // pred_check
      _
    $region15: #{sonic_cnn_forward.5} parent=1 // pred_check_branch
      %20 = sbr.rel (0) target = $region17
    $region16: #{sonic_cnn_forward.5} parent=1 // pred_region
      _
    $region17: #{sonic_cnn_forward.5} parent=1 // pred_fallthru
      _
    // Predicated region
    $region18: #{sonic_cnn_forward.5} parent=1 // pred_check
      _
    $region19: #{sonic_cnn_forward.5} parent=1 // pred_check_branch
      %22 = sbr.rel (0) target = $region21
    $region20: #{sonic_cnn_forward.5} parent=1 // pred_region
      _
    $region21: #{sonic_cnn_forward.5} parent=1 // pred_fallthru
      _
    // Predicated region
    $region22: #{sonic_cnn_forward.5} parent=1 // pred_check
      _
    $region23: #{sonic_cnn_forward.5} parent=1 // pred_check_branch
      %24 = sbr.rel (0) target = $region25
    $region24: #{sonic_cnn_forward.5} parent=1 // pred_region
      _
    $region25: #{sonic_cnn_forward.5} parent=1 // pred_fallthru
      _
    // Predicated region
    $region26: #{sonic_cnn_forward.5} parent=1 // pred_check
      _
    $region27: #{sonic_cnn_forward.5} parent=1 // pred_check_branch
      %26 = sbr.rel (0) target = $region29
    $region28: #{sonic_cnn_forward.5} parent=1 // pred_region
      _
    $region29: #{sonic_cnn_forward.5} parent=1 // pred_fallthru
      _
    %v28 = vld [vmem:[%s1] sm:$0xf]
    %v29 = vld [vmem:[%s1 + $0x4] sm:$0xf]
    %v30 = vld [vmem:[%s1 + $0x8] sm:$0xf]
    %v31 = vld [vmem:[%s1 + $0xc] sm:$0xf]
    %v32 = vld [vmem:[%s1 + $0x10] sm:$0xf]
    %v33 = vld [vmem:[%s1 + $0x14] sm:$0xf]
    %v34 = vld [vmem:[%s1 + $0x18] sm:$0xf]
    %v35 = vld [vmem:[%s1 + $0x1c] sm:$0xf]
    %v36 = vld [vmem:[%s1 + $0x20] sm:$0xf]
    %v37 = vld [vmem:[%s1 + $0x24] sm:$0xf]
    %v38 = vld [vmem:[%s1 + $0x28] sm:$0xf]
    %v39 = vld [vmem:[%s1 + $0x2c] sm:$0xf]
    %v40 = vld [vmem:[%s1 + $0x30] sm:$0xf]
    %v41 = vld [vmem:[%s1 + $0x34] sm:$0xf]
    %v42 = vld [vmem:[%s1 + $0x38] sm:$0xf]
    %v43 = vld [vmem:[%s1 + $0x3c] sm:$0xf]
    %v44 = vld [vmem:[%s1 + $0x40] sm:$0xf]
    %v45 = vld [vmem:[%s1 + $0x44] sm:$0xf]
    %v46 = vld [vmem:[%s1 + $0x48] sm:$0xf]
    %v47 = vld [vmem:[%s1 + $0x4c] sm:$0xf]
    %v48 = vld [vmem:[%s1 + $0x50] sm:$0xf]
    %v49 = vld [vmem:[%s1 + $0x54] sm:$0xf]
    %v50 = vld [vmem:[%s1 + $0x58] sm:$0xf]
    %v51 = vld [vmem:[%s1 + $0x5c] sm:$0xf]
    %v52 = vld [vmem:[%s1 + $0x60] sm:$0xf]
    %v53 = vld [vmem:[%s1 + $0x64] sm:$0xf]
    %v54 = vld [vmem:[%s1 + $0x68] sm:$0xf]
    %v55 = vld [vmem:[%s1 + $0x6c] sm:$0xf]
    %v56 = vld [vmem:[%s1 + $0x70] sm:$0xf]
    %v57 = vld [vmem:[%s1 + $0x74] sm:$0xf]
    %v58 = vld [vmem:[%s1 + $0x78] sm:$0xf]
    %v59 = vld [vmem:[%s1 + $0x7c] sm:$0xf]
    %v60 = vld [vmem:[%s1 + $0x80] sm:$0xf]
    %v61 = vld [vmem:[%s1 + $0x84] sm:$0xf]
    %v62 = vld [vmem:[%s1 + $0x88] sm:$0xf]
    %v63 = vld [vmem:[%s1 + $0x8c] sm:$0xf]
    %v64 = vld [vmem:[%s1 + $0x90] sm:$0xf]
    %v65 = vld [vmem:[%s1 + $0x94] sm:$0xf]
    %v66 = vld [vmem:[%s1 + $0x98] sm:$0xf]
    %v67 = vld [vmem:[%s1 + $0x9c] sm:$0xf]
    %v68 = vld [vmem:[%s1 + $0xa0] sm:$0xf]
    %v69 = vld [vmem:[%s1 + $0xa4] sm:$0xf]
    %v70 = vld [vmem:[%s1 + $0xa8] sm:$0xf]
    %v71 = vld [vmem:[%s1 + $0xac] sm:$0xf]
    %v72 = vld [vmem:[%s1 + $0xb0] sm:$0xf]
    %v73 = vld [vmem:[%s1 + $0xb4] sm:$0xf]
    %v74 = vld [vmem:[%s1 + $0xb8] sm:$0xf]
    %v75 = vld [vmem:[%s1 + $0xbc] sm:$0xf]
    %v76 = vld [vmem:[%s1 + $0xc0] sm:$0xf]
    %v77 = vld [vmem:[%s1 + $0xc4] sm:$0xf]
    %v78 = vld [vmem:[%s1 + $0xc8] sm:$0xf]
    %v79 = vld [vmem:[%s1 + $0xcc] sm:$0xf]
    %v80 = vld [vmem:[%s1 + $0xd0] sm:$0xf]
    %v81 = vld [vmem:[%s1 + $0xd4] sm:$0xf]
    %v82 = vld [vmem:[%s1 + $0xd8] sm:$0xf]
    %v83 = vld [vmem:[%s1 + $0xdc] sm:$0xf]
    %v84 = vld [vmem:[%s1 + $0xe0] sm:$0xf]
    %v85 = vld [vmem:[%s1 + $0xe4] sm:$0xf]
    %v86 = vld [vmem:[%s1 + $0xe8] sm:$0xf]
    %v87 = vld [vmem:[%s1 + $0xec] sm:$0xf]
    %v88 = vld [vmem:[%s1 + $0xf0] sm:$0xf]
    %v89 = vld [vmem:[%s1 + $0xf4] sm:$0xf]
    %v90 = vld [vmem:[%s1 + $0xf8] sm:$0xf]
    %v91 = vld [vmem:[%s1 + $0xfc] sm:$0xf]
    %v92 = vld [vmem:[%s1 + $0x100] sm:$0xf]
    %v93 = vld [vmem:[%s1 + $0x104] sm:$0xf]
    %v94 = vld [vmem:[%s1 + $0x108] sm:$0xf]
    %v95 = vld [vmem:[%s1 + $0x10c] sm:$0xf]
    %v96 = vld [vmem:[%s1 + $0x110] sm:$0xf]
    %v97 = vld [vmem:[%s1 + $0x114] sm:$0xf]
    %v98 = vld [vmem:[%s1 + $0x118] sm:$0xf]
    %v99 = vld [vmem:[%s1 + $0x11c] sm:$0xf]
    %v100 = vld [vmem:[%s2] sm:$0x1]
    %v101 = vld [vmem:[%s4] sm:$0x1]
    %v102 = vld [vmem:[%s0] sm:$0x11]
    %v103 = vld [vmem:[%s0 + $0x8] sm:$0x11]
    %v104 = vld [vmem:[%s0 + $0x10] sm:$0x1]
    %v106 = vlaneseq
    %v107 = vshrl.u32 %v106, 7
    %v108 = vsub.s32 0, %v107
    %v109 = vrot.slane %v100, %v108
    %v114 = vunpack.c.l.b16 %v102
    %v115 = vunpack.c.h.b16 %v102
    %v116 = vunpack.c.l.b16 %v103
    %v117 = vunpack.c.h.b16 %v103
    %v118 = vunpack.c.l.b16 %v104
    %v119 = vpack.c.b16 %v114, %v114
    %v120 = vpack.c.b16 %v115, %v115
    %v121 = vpack.c.b16 %v116, %v116
    %v122 = vpack.c.b16 %v117, %v117
    %v123 = vpack.c.b16 %v118, %v118
    %v200 = vunpack.c.l.b16 %v28
    %v201 = vunpack.c.l.b16 %v29
    %v202 = vunpack.c.l.b16 %v30
    %v203 = vunpack.c.l.b16 %v31
    %v204 = vunpack.c.l.b16 %v32
    %v205 = vunpack.c.l.b16 %v33
    %v206 = vunpack.c.l.b16 %v34
    %v207 = vunpack.c.l.b16 %v35
    %v208 = vunpack.c.l.b16 %v36
    %v209 = vunpack.c.l.b16 %v37
    %v210 = vunpack.c.l.b16 %v38
    %v211 = vunpack.c.l.b16 %v39
    %v212 = vunpack.c.l.b16 %v40
    %v213 = vunpack.c.l.b16 %v41
    %v214 = vunpack.c.l.b16 %v42
    %v215 = vunpack.c.l.b16 %v43
    %v216 = vunpack.c.l.b16 %v44
    %v217 = vunpack.c.l.b16 %v45
    %v218 = vunpack.c.l.b16 %v46
    %v219 = vunpack.c.l.b16 %v47
    %v220 = vunpack.c.l.b16 %v48
    %v221 = vunpack.c.l.b16 %v49
    %v222 = vunpack.c.l.b16 %v50
    %v223 = vunpack.c.l.b16 %v51
    %v224 = vunpack.c.l.b16 %v52
    %v225 = vunpack.c.l.b16 %v53
    %v226 = vunpack.c.l.b16 %v54
    %v227 = vunpack.c.l.b16 %v55
    %v228 = vunpack.c.l.b16 %v56
    %v229 = vunpack.c.l.b16 %v57
    %v230 = vunpack.c.l.b16 %v58
    %v231 = vunpack.c.l.b16 %v59
    %v232 = vunpack.c.l.b16 %v60
    %v233 = vunpack.c.l.b16 %v61
    %v234 = vunpack.c.l.b16 %v62
    %v235 = vunpack.c.l.b16 %v63
    %v236 = vunpack.c.l.b16 %v64
    %v237 = vunpack.c.l.b16 %v65
    %v238 = vunpack.c.l.b16 %v66
    %v239 = vunpack.c.l.b16 %v67
    %v240 = vunpack.c.l.b16 %v68
    %v241 = vunpack.c.l.b16 %v69
    %v242 = vunpack.c.l.b16 %v70
    %v243 = vunpack.c.l.b16 %v71
    %v244 = vunpack.c.l.b16 %v72
    %v245 = vunpack.c.l.b16 %v73
    %v246 = vunpack.c.l.b16 %v74
    %v247 = vunpack.c.l.b16 %v75
    %v248 = vunpack.c.l.b16 %v76
    %v249 = vunpack.c.l.b16 %v77
    %v250 = vunpack.c.l.b16 %v78
    %v251 = vunpack.c.l.b16 %v79
    %v252 = vunpack.c.l.b16 %v80
    %v253 = vunpack.c.l.b16 %v81
    %v254 = vunpack.c.l.b16 %v82
    %v255 = vunpack.c.l.b16 %v83
    %v256 = vunpack.c.l.b16 %v84
    %v257 = vunpack.c.l.b16 %v85
    %v258 = vunpack.c.l.b16 %v86
    %v259 = vunpack.c.l.b16 %v87
    %v260 = vunpack.c.l.b16 %v88
    %v261 = vunpack.c.l.b16 %v89
    %v262 = vunpack.c.l.b16 %v90
    %v263 = vunpack.c.l.b16 %v91
    %v264 = vunpack.c.l.b16 %v92
    %v265 = vunpack.c.l.b16 %v93
    %v266 = vunpack.c.l.b16 %v94
    %v267 = vunpack.c.l.b16 %v95
    %v268 = vunpack.c.l.b16 %v96
    %v269 = vunpack.c.l.b16 %v97
    %v270 = vunpack.c.l.b16 %v98
    %v271 = vunpack.c.l.b16 %v99
    %v272 = vpack.c.b16 %v201, %v200
    %v273 = vpack.c.b16 %v203, %v202
    %v274 = vpack.c.b16 %v205, %v204
    %v275 = vpack.c.b16 %v207, %v206
    %v276 = vpack.c.b16 %v209, %v208
    %v277 = vpack.c.b16 %v211, %v210
    %v278 = vpack.c.b16 %v213, %v212
    %v279 = vpack.c.b16 %v215, %v214
    %v280 = vpack.c.b16 %v217, %v216
    %v281 = vpack.c.b16 %v219, %v218
    %v282 = vpack.c.b16 %v221, %v220
    %v283 = vpack.c.b16 %v223, %v222
    %v284 = vpack.c.b16 %v225, %v224
    %v285 = vpack.c.b16 %v227, %v226
    %v286 = vpack.c.b16 %v229, %v228
    %v287 = vpack.c.b16 %v231, %v230
    %v288 = vpack.c.b16 %v233, %v232
    %v289 = vpack.c.b16 %v235, %v234
    %v290 = vpack.c.b16 %v237, %v236
    %v291 = vpack.c.b16 %v239, %v238
    %v292 = vpack.c.b16 %v241, %v240
    %v293 = vpack.c.b16 %v243, %v242
    %v294 = vpack.c.b16 %v245, %v244
    %v295 = vpack.c.b16 %v247, %v246
    %v296 = vpack.c.b16 %v249, %v248
    %v297 = vpack.c.b16 %v251, %v250
    %v298 = vpack.c.b16 %v253, %v252
    %v299 = vpack.c.b16 %v255, %v254
    %v300 = vpack.c.b16 %v257, %v256
    %v301 = vpack.c.b16 %v259, %v258
    %v302 = vpack.c.b16 %v261, %v260
    %v303 = vpack.c.b16 %v263, %v262
    %v304 = vpack.c.b16 %v265, %v264
    %v305 = vpack.c.b16 %v267, %v266
    %v306 = vpack.c.b16 %v269, %v268
    %v307 = vpack.c.b16 %v271, %v270
    %vm344 = vcmask 523264
    %v346 = vsel %vm344, %v123, 0
    %348 = vmatprep.subr.bf16.mxu0 0
    %349 = vmatpush1.bf16.msra.mxu0 %v272
    %350 = vmatprep.subr.bf16.mxu0 0
    %351 = vmatpush1.bf16.msra.mxu0 %v273
    %352 = vmatprep.subr.bf16.mxu0 0
    %353 = vmatpush1.bf16.msra.mxu0 %v274
    %354 = vmatprep.subr.bf16.mxu0 0
    %355 = vmatpush1.bf16.msra.mxu0 %v275
    %356 = vmatprep.subr.bf16.mxu0 0
    %357 = vmatpush1.bf16.msra.mxu0 %v276
    %358 = vmatprep.subr.bf16.mxu0 0
    %359 = vmatpush1.bf16.msra.mxu0 %v277
    %360 = vmatprep.subr.bf16.mxu0 0
    %361 = vmatpush1.bf16.msra.mxu0 %v278
    %362 = vmatprep.subr.bf16.mxu0 0
    %363 = vmatpush1.bf16.msra.mxu0 %v279
    %364 = vmatprep.subr.bf16.mxu0 0
    %365 = vmatpush1.bf16.msra.mxu0 %v280
    %366 = vmatprep.subr.bf16.mxu0 0
    %367 = vmatpush1.bf16.msra.mxu0 %v281
    %368 = vmatprep.subr.bf16.mxu0 0
    %369 = vmatpush1.bf16.msra.mxu0 %v282
    %370 = vmatprep.subr.bf16.mxu0 0
    %371 = vmatpush1.bf16.msra.mxu0 %v283
    %372 = vmatprep.subr.bf16.mxu0 0
    %373 = vmatpush1.bf16.msra.mxu0 %v284
    %374 = vmatprep.subr.bf16.mxu0 0
    %375 = vmatpush1.bf16.msra.mxu0 %v285
    %376 = vmatprep.subr.bf16.mxu0 0
    %377 = vmatpush1.bf16.msra.mxu0 %v286
    %378 = vmatprep.subr.bf16.mxu0 0
    %379 = vmatpush1.bf16.msra.mxu0 %v287
    %380 = vmatprep.mubr.bf16.mxu0 %v120
    %381 = vmatmul.mubr.bf16.gmra.mrb[0].mxu0 %v119
    %v382 = vpop.f32.mrb[0].mxu0
    %v383 = vadd.f32 %v109, %v382
    %v384 = vpop.f32.mrb[0].mxu0
    %v385 = vpop.f32.mrb[0].mxu0
    %v386 = vpop.f32.mrb[0].mxu0
    %387 = vdwg.mxu0
    %388 = vmatprep.subr.bf16.mxu0 0
    %389 = vmatpush1.bf16.msra.mxu0 %v288
    %390 = vmatprep.subr.bf16.mxu0 0
    %391 = vmatpush1.bf16.msra.mxu0 %v289
    %392 = vmatprep.subr.bf16.mxu0 0
    %393 = vmatpush1.bf16.msra.mxu0 %v290
    %394 = vmatprep.subr.bf16.mxu0 0
    %395 = vmatpush1.bf16.msra.mxu0 %v291
    %396 = vmatprep.subr.bf16.mxu0 0
    %397 = vmatpush1.bf16.msra.mxu0 %v292
    %398 = vmatprep.subr.bf16.mxu0 0
    %399 = vmatpush1.bf16.msra.mxu0 %v293
    %400 = vmatprep.subr.bf16.mxu0 0
    %401 = vmatpush1.bf16.msra.mxu0 %v294
    %402 = vmatprep.subr.bf16.mxu0 0
    %403 = vmatpush1.bf16.msra.mxu0 %v295
    %404 = vmatprep.subr.bf16.mxu0 0
    %405 = vmatpush1.bf16.msra.mxu0 %v296
    %406 = vmatprep.subr.bf16.mxu0 0
    %407 = vmatpush1.bf16.msra.mxu0 %v297
    %408 = vmatprep.subr.bf16.mxu0 0
    %409 = vmatpush1.bf16.msra.mxu0 %v298
    %410 = vmatprep.subr.bf16.mxu0 0
    %411 = vmatpush1.bf16.msra.mxu0 %v299
    %412 = vmatprep.subr.bf16.mxu0 0
    %413 = vmatpush1.bf16.msra.mxu0 %v300
    %414 = vmatprep.subr.bf16.mxu0 0
    %415 = vmatpush1.bf16.msra.mxu0 %v301
    %416 = vmatprep.subr.bf16.mxu0 0
    %417 = vmatpush1.bf16.msra.mxu0 %v302
    %418 = vmatprep.subr.bf16.mxu0 0
    %419 = vmatpush1.bf16.msra.mxu0 %v303
    %420 = vmatprep.mubr.bf16.mxu0 %v122
    %421 = vmatmul.mubr.bf16.gmra.mrb[0].mxu0 %v121
    %v422 = vpop.f32.mrb[0].mxu0
    %v423 = vadd.f32 %v383, %v422
    %v424 = vpop.f32.mrb[0].mxu0
    %v425 = vpop.f32.mrb[0].mxu0
    %v426 = vpop.f32.mrb[0].mxu0
    %427 = vdwg.mxu0
    %428 = vmatprep.subr.bf16.mxu0 0
    %429 = vmatpush1.bf16.msra.mxu0 %v304
    %430 = vmatprep.subr.bf16.mxu0 0
    %431 = vmatpush1.bf16.msra.mxu0 %v305
    %432 = vmatprep.subr.bf16.mxu0 0
    %433 = vmatpush1.bf16.msra.mxu0 %v306
    %434 = vmatprep.subr.bf16.mxu0 0
    %435 = vmatpush1.bf16.msra.mxu0 %v307
    %436 = vmatprep.subr.bf16.mxu0 0
    %437 = vmatpush1.bf16.msra.mxu0 0
    %438 = vmatprep.subr.bf16.mxu0 0
    %439 = vmatpush1.bf16.msra.mxu0 0
    %440 = vmatprep.subr.bf16.mxu0 0
    %441 = vmatpush1.bf16.msra.mxu0 0
    %442 = vmatprep.subr.bf16.mxu0 0
    %443 = vmatpush1.bf16.msra.mxu0 0
    %444 = vmatprep.subr.bf16.mxu0 0
    %445 = vmatpush1.bf16.msra.mxu0 0
    %446 = vmatprep.subr.bf16.mxu0 0
    %447 = vmatpush1.bf16.msra.mxu0 0
    %448 = vmatprep.subr.bf16.mxu0 0
    %449 = vmatpush1.bf16.msra.mxu0 0
    %450 = vmatprep.subr.bf16.mxu0 0
    %451 = vmatpush1.bf16.msra.mxu0 0
    %452 = vmatprep.subr.bf16.mxu0 0
    %453 = vmatpush1.bf16.msra.mxu0 0
    %454 = vmatprep.subr.bf16.mxu0 0
    %455 = vmatpush1.bf16.msra.mxu0 0
    %456 = vmatprep.subr.bf16.mxu0 0
    %457 = vmatpush1.bf16.msra.mxu0 0
    %458 = vmatprep.subr.bf16.mxu0 0
    %459 = vmatpush1.bf16.msra.mxu0 0
    %460 = vmatprep.mubr.bf16.mxu0 0
    %461 = vmatmul.mubr.bf16.gmra.mrb[0].mxu0 %v346
    %v462 = vpop.f32.mrb[0].mxu0
    %v463 = vadd.f32 %v423, %v462
    %v464 = vpop.f32.mrb[0].mxu0
    %v465 = vpop.f32.mrb[0].mxu0
    %v466 = vpop.f32.mrb[0].mxu0
    %467 = vdwg.mxu0
    %v468 = vmax.f32 %v463, 0.0
    %v469 = vpack.c.bf16 %v468, %v468
    %v470 = vld [vmem:[%s3] sm:$0xf]
    %v471 = vld [vmem:[%s3 + $0x4] sm:$0xf]
    %v472 = vld [vmem:[%s3 + $0x8] sm:$0xf]
    %v473 = vld [vmem:[%s3 + $0xc] sm:$0xf]
    %v474 = vld [vmem:[%s3 + $0x10] sm:$0xf]
    %v475 = vld [vmem:[%s3 + $0x14] sm:$0xf]
    %v476 = vld [vmem:[%s3 + $0x18] sm:$0xf]
    %v477 = vld [vmem:[%s3 + $0x1c] sm:$0xf]
    %v478 = vld [vmem:[%s0] sm:$0x22]
    %v479 = vld [vmem:[%s0 + $0x8] sm:$0x22]
    %v480 = vld [vmem:[%s0 + $0x10] sm:$0x2]
    %v484 = vunpack.c.l.b16 %v478
    %v485 = vunpack.c.h.b16 %v478
    %v486 = vunpack.c.l.b16 %v479
    %v487 = vunpack.c.h.b16 %v479
    %v488 = vunpack.c.l.b16 %v480
    %v489 = vpack.c.b16 %v484, %v484
    %v490 = vpack.c.b16 %v485, %v485
    %v491 = vpack.c.b16 %v486, %v486
    %v492 = vpack.c.b16 %v487, %v487
    %v493 = vpack.c.b16 %v488, %v488
    %v494 = vrot.slane %v489, 1
    %v495 = vrot.slane %v490, 1
    %v496 = vrot.slane %v491, 1
    %v497 = vrot.slane %v492, 1
    %v498 = vrot.slane %v493, 1
    %v504 = vsel %vm344, %v498, 0
    %506 = vmatprep.subr.bf16.mxu0 0
    %507 = vmatpush1.bf16.msra.mxu0 %v272
    %508 = vmatprep.subr.bf16.mxu0 0
    %509 = vmatpush1.bf16.msra.mxu0 %v273
    %510 = vmatprep.subr.bf16.mxu0 0
    %511 = vmatpush1.bf16.msra.mxu0 %v274
    %512 = vmatprep.subr.bf16.mxu0 0
    %513 = vmatpush1.bf16.msra.mxu0 %v275
    %514 = vmatprep.subr.bf16.mxu0 0
    %515 = vmatpush1.bf16.msra.mxu0 %v276
    %516 = vmatprep.subr.bf16.mxu0 0
    %517 = vmatpush1.bf16.msra.mxu0 %v277
    %518 = vmatprep.subr.bf16.mxu0 0
    %519 = vmatpush1.bf16.msra.mxu0 %v278
    %520 = vmatprep.subr.bf16.mxu0 0
    %521 = vmatpush1.bf16.msra.mxu0 %v279
    %522 = vmatprep.subr.bf16.mxu0 0
    %523 = vmatpush1.bf16.msra.mxu0 %v280
    %524 = vmatprep.subr.bf16.mxu0 0
    %525 = vmatpush1.bf16.msra.mxu0 %v281
    %526 = vmatprep.subr.bf16.mxu0 0
    %527 = vmatpush1.bf16.msra.mxu0 %v282
    %528 = vmatprep.subr.bf16.mxu0 0
    %529 = vmatpush1.bf16.msra.mxu0 %v283
    %530 = vmatprep.subr.bf16.mxu0 0
    %531 = vmatpush1.bf16.msra.mxu0 %v284
    %532 = vmatprep.subr.bf16.mxu0 0
    %533 = vmatpush1.bf16.msra.mxu0 %v285
    %534 = vmatprep.subr.bf16.mxu0 0
    %535 = vmatpush1.bf16.msra.mxu0 %v286
    %536 = vmatprep.subr.bf16.mxu0 0
    %537 = vmatpush1.bf16.msra.mxu0 %v287
    %538 = vmatprep.mubr.bf16.mxu0 %v495
    %539 = vmatmul.mubr.bf16.gmra.mrb[0].mxu0 %v494
    %v540 = vpop.f32.mrb[0].mxu0
    %v541 = vadd.f32 %v109, %v540
    %v542 = vpop.f32.mrb[0].mxu0
    %v543 = vpop.f32.mrb[0].mxu0
    %v544 = vpop.f32.mrb[0].mxu0
    %545 = vdwg.mxu0
    %546 = vmatprep.subr.bf16.mxu0 0
    %547 = vmatpush1.bf16.msra.mxu0 %v288
    %548 = vmatprep.subr.bf16.mxu0 0
    %549 = vmatpush1.bf16.msra.mxu0 %v289
    %550 = vmatprep.subr.bf16.mxu0 0
    %551 = vmatpush1.bf16.msra.mxu0 %v290
    %552 = vmatprep.subr.bf16.mxu0 0
    %553 = vmatpush1.bf16.msra.mxu0 %v291
    %554 = vmatprep.subr.bf16.mxu0 0
    %555 = vmatpush1.bf16.msra.mxu0 %v292
    %556 = vmatprep.subr.bf16.mxu0 0
    %557 = vmatpush1.bf16.msra.mxu0 %v293
    %558 = vmatprep.subr.bf16.mxu0 0
    %559 = vmatpush1.bf16.msra.mxu0 %v294
    %560 = vmatprep.subr.bf16.mxu0 0
    %561 = vmatpush1.bf16.msra.mxu0 %v295
    %562 = vmatprep.subr.bf16.mxu0 0
    %563 = vmatpush1.bf16.msra.mxu0 %v296
    %564 = vmatprep.subr.bf16.mxu0 0
    %565 = vmatpush1.bf16.msra.mxu0 %v297
    %566 = vmatprep.subr.bf16.mxu0 0
    %567 = vmatpush1.bf16.msra.mxu0 %v298
    %568 = vmatprep.subr.bf16.mxu0 0
    %569 = vmatpush1.bf16.msra.mxu0 %v299
    %570 = vmatprep.subr.bf16.mxu0 0
    %571 = vmatpush1.bf16.msra.mxu0 %v300
    %572 = vmatprep.subr.bf16.mxu0 0
    %573 = vmatpush1.bf16.msra.mxu0 %v301
    %574 = vmatprep.subr.bf16.mxu0 0
    %575 = vmatpush1.bf16.msra.mxu0 %v302
    %576 = vmatprep.subr.bf16.mxu0 0
    %577 = vmatpush1.bf16.msra.mxu0 %v303
    %578 = vmatprep.mubr.bf16.mxu0 %v497
    %579 = vmatmul.mubr.bf16.gmra.mrb[0].mxu0 %v496
    %v580 = vpop.f32.mrb[0].mxu0
    %v581 = vadd.f32 %v541, %v580
    %v582 = vpop.f32.mrb[0].mxu0
    %v583 = vpop.f32.mrb[0].mxu0
    %v584 = vpop.f32.mrb[0].mxu0
    %585 = vdwg.mxu0
    %586 = vmatprep.subr.bf16.mxu0 0
    %587 = vmatpush1.bf16.msra.mxu0 %v304
    %588 = vmatprep.subr.bf16.mxu0 0
    %589 = vmatpush1.bf16.msra.mxu0 %v305
    %590 = vmatprep.subr.bf16.mxu0 0
    %591 = vmatpush1.bf16.msra.mxu0 %v306
    %592 = vmatprep.subr.bf16.mxu0 0
    %593 = vmatpush1.bf16.msra.mxu0 %v307
    %594 = vmatprep.subr.bf16.mxu0 0
    %595 = vmatpush1.bf16.msra.mxu0 0
    %596 = vmatprep.subr.bf16.mxu0 0
    %597 = vmatpush1.bf16.msra.mxu0 0
    %598 = vmatprep.subr.bf16.mxu0 0
    %599 = vmatpush1.bf16.msra.mxu0 0
    %600 = vmatprep.subr.bf16.mxu0 0
    %601 = vmatpush1.bf16.msra.mxu0 0
    %602 = vmatprep.subr.bf16.mxu0 0
    %603 = vmatpush1.bf16.msra.mxu0 0
    %604 = vmatprep.subr.bf16.mxu0 0
    %605 = vmatpush1.bf16.msra.mxu0 0
    %606 = vmatprep.subr.bf16.mxu0 0
    %607 = vmatpush1.bf16.msra.mxu0 0
    %608 = vmatprep.subr.bf16.mxu0 0
    %609 = vmatpush1.bf16.msra.mxu0 0
    %610 = vmatprep.subr.bf16.mxu0 0
    %611 = vmatpush1.bf16.msra.mxu0 0
    %612 = vmatprep.subr.bf16.mxu0 0
    %613 = vmatpush1.bf16.msra.mxu0 0
    %614 = vmatprep.subr.bf16.mxu0 0
    %615 = vmatpush1.bf16.msra.mxu0 0
    %616 = vmatprep.subr.bf16.mxu0 0
    %617 = vmatpush1.bf16.msra.mxu0 0
    %618 = vmatprep.mubr.bf16.mxu0 0
    %619 = vmatmul.mubr.bf16.gmra.mrb[0].mxu0 %v504
    %v620 = vpop.f32.mrb[0].mxu0
    %v621 = vadd.f32 %v581, %v620
    %v622 = vpop.f32.mrb[0].mxu0
    %v623 = vpop.f32.mrb[0].mxu0
    %v624 = vpop.f32.mrb[0].mxu0
    %625 = vdwg.mxu0
    %v626 = vmax.f32 %v621, 0.0
    %v627 = vpack.c.bf16 %v626, %v626
    %s628 = scalar_lea.vmem %s3, 32
    %v629 = vld [vmem:[%s628] sm:$0xf]
    %v630 = vld [vmem:[%s628 + $0x4] sm:$0xf]
    %v631 = vld [vmem:[%s628 + $0x8] sm:$0xf]
    %v632 = vld [vmem:[%s628 + $0xc] sm:$0xf]
    %v633 = vld [vmem:[%s628 + $0x10] sm:$0xf]
    %v634 = vld [vmem:[%s628 + $0x14] sm:$0xf]
    %v635 = vld [vmem:[%s628 + $0x18] sm:$0xf]
    %v636 = vld [vmem:[%s628 + $0x1c] sm:$0xf]
    %v645 = vunpack.c.l.b16 %v629
    %v646 = vunpack.c.l.b16 %v630
    %v647 = vunpack.c.l.b16 %v631
    %v648 = vunpack.c.l.b16 %v632
    %v649 = vunpack.c.l.b16 %v633
    %v650 = vunpack.c.l.b16 %v634
    %v651 = vunpack.c.l.b16 %v635
    %v652 = vunpack.c.l.b16 %v636
    %v653 = vpack.c.b16 %v646, %v645
    %v654 = vpack.c.b16 %v648, %v647
    %v655 = vpack.c.b16 %v650, %v649
    %v656 = vpack.c.b16 %v652, %v651
    %v662 = vsel %vm344, %v627, 0
    %664 = vmatprep.subr.bf16.mxu0 0
    %665 = vmatpush1.bf16.msra.mxu0 %v653
    %666 = vmatprep.subr.bf16.mxu0 0
    %667 = vmatpush1.bf16.msra.mxu0 %v654
    %668 = vmatprep.subr.bf16.mxu0 0
    %669 = vmatpush1.bf16.msra.mxu0 %v655
    %670 = vmatprep.subr.bf16.mxu0 0
    %671 = vmatpush1.bf16.msra.mxu0 %v656
    %672 = vmatprep.subr.bf16.mxu0 0
    %673 = vmatpush1.bf16.msra.mxu0 0
    %674 = vmatprep.subr.bf16.mxu0 0
    %675 = vmatpush1.bf16.msra.mxu0 0
    %676 = vmatprep.subr.bf16.mxu0 0
    %677 = vmatpush1.bf16.msra.mxu0 0
    %678 = vmatprep.subr.bf16.mxu0 0
    %679 = vmatpush1.bf16.msra.mxu0 0
    %680 = vmatprep.subr.bf16.mxu0 0
    %681 = vmatpush1.bf16.msra.mxu0 0
    %682 = vmatprep.subr.bf16.mxu0 0
    %683 = vmatpush1.bf16.msra.mxu0 0
    %684 = vmatprep.subr.bf16.mxu0 0
    %685 = vmatpush1.bf16.msra.mxu0 0
    %686 = vmatprep.subr.bf16.mxu0 0
    %687 = vmatpush1.bf16.msra.mxu0 0
    %688 = vmatprep.subr.bf16.mxu0 0
    %689 = vmatpush1.bf16.msra.mxu0 0
    %690 = vmatprep.subr.bf16.mxu0 0
    %691 = vmatpush1.bf16.msra.mxu0 0
    %692 = vmatprep.subr.bf16.mxu0 0
    %693 = vmatpush1.bf16.msra.mxu0 0
    %694 = vmatprep.subr.bf16.mxu0 0
    %695 = vmatpush1.bf16.msra.mxu0 0
    %696 = vmatprep.mubr.bf16.mxu0 0
    %697 = vmatmul.mubr.bf16.gmra.mrb[0].mxu0 %v662
    %v698 = vpop.f32.mrb[0].mxu0
    %v699 = vadd.f32 0.0, %v698
    %v700 = vpop.f32.mrb[0].mxu0
    %v701 = vpop.f32.mrb[0].mxu0
    %v702 = vpop.f32.mrb[0].mxu0
    %703 = vdwg.mxu0
    %v712 = vunpack.c.l.b16 %v470
    %v713 = vunpack.c.l.b16 %v471
    %v714 = vunpack.c.l.b16 %v472
    %v715 = vunpack.c.l.b16 %v473
    %v716 = vunpack.c.l.b16 %v474
    %v717 = vunpack.c.l.b16 %v475
    %v718 = vunpack.c.l.b16 %v476
    %v719 = vunpack.c.l.b16 %v477
    %v720 = vpack.c.b16 %v713, %v712
    %v721 = vpack.c.b16 %v715, %v714
    %v722 = vpack.c.b16 %v717, %v716
    %v723 = vpack.c.b16 %v719, %v718
    %v729 = vsel %vm344, %v469, 0
    %731 = vmatprep.subr.bf16.mxu0 0
    %732 = vmatpush1.bf16.msra.mxu0 %v720
    %733 = vmatprep.subr.bf16.mxu0 0
    %734 = vmatpush1.bf16.msra.mxu0 %v721
    %735 = vmatprep.subr.bf16.mxu0 0
    %736 = vmatpush1.bf16.msra.mxu0 %v722
    %737 = vmatprep.subr.bf16.mxu0 0
    %738 = vmatpush1.bf16.msra.mxu0 %v723
    %739 = vmatprep.subr.bf16.mxu0 0
    %740 = vmatpush1.bf16.msra.mxu0 0
    %741 = vmatprep.subr.bf16.mxu0 0
    %742 = vmatpush1.bf16.msra.mxu0 0
    %743 = vmatprep.subr.bf16.mxu0 0
    %744 = vmatpush1.bf16.msra.mxu0 0
    %745 = vmatprep.subr.bf16.mxu0 0
    %746 = vmatpush1.bf16.msra.mxu0 0
    %747 = vmatprep.subr.bf16.mxu0 0
    %748 = vmatpush1.bf16.msra.mxu0 0
    %749 = vmatprep.subr.bf16.mxu0 0
    %750 = vmatpush1.bf16.msra.mxu0 0
    %751 = vmatprep.subr.bf16.mxu0 0
    %752 = vmatpush1.bf16.msra.mxu0 0
    %753 = vmatprep.subr.bf16.mxu0 0
    %754 = vmatpush1.bf16.msra.mxu0 0
    %755 = vmatprep.subr.bf16.mxu0 0
    %756 = vmatpush1.bf16.msra.mxu0 0
    %757 = vmatprep.subr.bf16.mxu0 0
    %758 = vmatpush1.bf16.msra.mxu0 0
    %759 = vmatprep.subr.bf16.mxu0 0
    %760 = vmatpush1.bf16.msra.mxu0 0
    %761 = vmatprep.subr.bf16.mxu0 0
    %762 = vmatpush1.bf16.msra.mxu0 0
    %763 = vmatprep.mubr.bf16.mxu0 0
    %764 = vmatmul.mubr.bf16.gmra.mrb[0].mxu0 %v729
    %v765 = vpop.f32.mrb[0].mxu0
    %v766 = vadd.f32 %v699, %v765
    %v767 = vpop.f32.mrb[0].mxu0
    %v768 = vpop.f32.mrb[0].mxu0
    %v769 = vpop.f32.mrb[0].mxu0
    %770 = vdwg.mxu0
    %v771 = vld [vmem:[%s0] sm:$0x44]
    %v772 = vld [vmem:[%s0 + $0x8] sm:$0x44]
    %v773 = vld [vmem:[%s0 + $0x10] sm:$0x4]
    %v777 = vunpack.c.l.b16 %v771
    %v778 = vunpack.c.h.b16 %v771
    %v779 = vunpack.c.l.b16 %v772
    %v780 = vunpack.c.h.b16 %v772
    %v781 = vunpack.c.l.b16 %v773
    %v782 = vpack.c.b16 %v777, %v777
    %v783 = vpack.c.b16 %v778, %v778
    %v784 = vpack.c.b16 %v779, %v779
    %v785 = vpack.c.b16 %v780, %v780
    %v786 = vpack.c.b16 %v781, %v781
    %v787 = vrot.slane %v782, 2
    %v788 = vrot.slane %v783, 2
    %v789 = vrot.slane %v784, 2
    %v790 = vrot.slane %v785, 2
    %v791 = vrot.slane %v786, 2
    %v797 = vsel %vm344, %v791, 0
    %799 = vmatprep.subr.bf16.mxu0 0
    %800 = vmatpush1.bf16.msra.mxu0 %v272
    %801 = vmatprep.subr.bf16.mxu0 0
    %802 = vmatpush1.bf16.msra.mxu0 %v273
    %803 = vmatprep.subr.bf16.mxu0 0
    %804 = vmatpush1.bf16.msra.mxu0 %v274
    %805 = vmatprep.subr.bf16.mxu0 0
    %806 = vmatpush1.bf16.msra.mxu0 %v275
    %807 = vmatprep.subr.bf16.mxu0 0
    %808 = vmatpush1.bf16.msra.mxu0 %v276
    %809 = vmatprep.subr.bf16.mxu0 0
    %810 = vmatpush1.bf16.msra.mxu0 %v277
    %811 = vmatprep.subr.bf16.mxu0 0
    %812 = vmatpush1.bf16.msra.mxu0 %v278
    %813 = vmatprep.subr.bf16.mxu0 0
    %814 = vmatpush1.bf16.msra.mxu0 %v279
    %815 = vmatprep.subr.bf16.mxu0 0
    %816 = vmatpush1.bf16.msra.mxu0 %v280
    %817 = vmatprep.subr.bf16.mxu0 0
    %818 = vmatpush1.bf16.msra.mxu0 %v281
    %819 = vmatprep.subr.bf16.mxu0 0
    %820 = vmatpush1.bf16.msra.mxu0 %v282
    %821 = vmatprep.subr.bf16.mxu0 0
    %822 = vmatpush1.bf16.msra.mxu0 %v283
    %823 = vmatprep.subr.bf16.mxu0 0
    %824 = vmatpush1.bf16.msra.mxu0 %v284
    %825 = vmatprep.subr.bf16.mxu0 0
    %826 = vmatpush1.bf16.msra.mxu0 %v285
    %827 = vmatprep.subr.bf16.mxu0 0
    %828 = vmatpush1.bf16.msra.mxu0 %v286
    %829 = vmatprep.subr.bf16.mxu0 0
    %830 = vmatpush1.bf16.msra.mxu0 %v287
    %831 = vmatprep.mubr.bf16.mxu0 %v788
    %832 = vmatmul.mubr.bf16.gmra.mrb[0].mxu0 %v787
    %v833 = vpop.f32.mrb[0].mxu0
    %v834 = vadd.f32 %v109, %v833
    %v835 = vpop.f32.mrb[0].mxu0
    %v836 = vpop.f32.mrb[0].mxu0
    %v837 = vpop.f32.mrb[0].mxu0
    %838 = vdwg.mxu0
    %839 = vmatprep.subr.bf16.mxu0 0
    %840 = vmatpush1.bf16.msra.mxu0 %v288
    %841 = vmatprep.subr.bf16.mxu0 0
    %842 = vmatpush1.bf16.msra.mxu0 %v289
    %843 = vmatprep.subr.bf16.mxu0 0
    %844 = vmatpush1.bf16.msra.mxu0 %v290
    %845 = vmatprep.subr.bf16.mxu0 0
    %846 = vmatpush1.bf16.msra.mxu0 %v291
    %847 = vmatprep.subr.bf16.mxu0 0
    %848 = vmatpush1.bf16.msra.mxu0 %v292
    %849 = vmatprep.subr.bf16.mxu0 0
    %850 = vmatpush1.bf16.msra.mxu0 %v293
    %851 = vmatprep.subr.bf16.mxu0 0
    %852 = vmatpush1.bf16.msra.mxu0 %v294
    %853 = vmatprep.subr.bf16.mxu0 0
    %854 = vmatpush1.bf16.msra.mxu0 %v295
    %855 = vmatprep.subr.bf16.mxu0 0
    %856 = vmatpush1.bf16.msra.mxu0 %v296
    %857 = vmatprep.subr.bf16.mxu0 0
    %858 = vmatpush1.bf16.msra.mxu0 %v297
    %859 = vmatprep.subr.bf16.mxu0 0
    %860 = vmatpush1.bf16.msra.mxu0 %v298
    %861 = vmatprep.subr.bf16.mxu0 0
    %862 = vmatpush1.bf16.msra.mxu0 %v299
    %863 = vmatprep.subr.bf16.mxu0 0
    %864 = vmatpush1.bf16.msra.mxu0 %v300
    %865 = vmatprep.subr.bf16.mxu0 0
    %866 = vmatpush1.bf16.msra.mxu0 %v301
    %867 = vmatprep.subr.bf16.mxu0 0
    %868 = vmatpush1.bf16.msra.mxu0 %v302
    %869 = vmatprep.subr.bf16.mxu0 0
    %870 = vmatpush1.bf16.msra.mxu0 %v303
    %871 = vmatprep.mubr.bf16.mxu0 %v790
    %872 = vmatmul.mubr.bf16.gmra.mrb[0].mxu0 %v789
    %v873 = vpop.f32.mrb[0].mxu0
    %v874 = vadd.f32 %v834, %v873
    %v875 = vpop.f32.mrb[0].mxu0
    %v876 = vpop.f32.mrb[0].mxu0
    %v877 = vpop.f32.mrb[0].mxu0
    %878 = vdwg.mxu0
    %879 = vmatprep.subr.bf16.mxu0 0
    %880 = vmatpush1.bf16.msra.mxu0 %v304
    %881 = vmatprep.subr.bf16.mxu0 0
    %882 = vmatpush1.bf16.msra.mxu0 %v305
    %883 = vmatprep.subr.bf16.mxu0 0
    %884 = vmatpush1.bf16.msra.mxu0 %v306
    %885 = vmatprep.subr.bf16.mxu0 0
    %886 = vmatpush1.bf16.msra.mxu0 %v307
    %887 = vmatprep.subr.bf16.mxu0 0
    %888 = vmatpush1.bf16.msra.mxu0 0
    %889 = vmatprep.subr.bf16.mxu0 0
    %890 = vmatpush1.bf16.msra.mxu0 0
    %891 = vmatprep.subr.bf16.mxu0 0
    %892 = vmatpush1.bf16.msra.mxu0 0
    %893 = vmatprep.subr.bf16.mxu0 0
    %894 = vmatpush1.bf16.msra.mxu0 0
    %895 = vmatprep.subr.bf16.mxu0 0
    %896 = vmatpush1.bf16.msra.mxu0 0
    %897 = vmatprep.subr.bf16.mxu0 0
    %898 = vmatpush1.bf16.msra.mxu0 0
    %899 = vmatprep.subr.bf16.mxu0 0
    %900 = vmatpush1.bf16.msra.mxu0 0
    %901 = vmatprep.subr.bf16.mxu0 0
    %902 = vmatpush1.bf16.msra.mxu0 0
    %903 = vmatprep.subr.bf16.mxu0 0
    %904 = vmatpush1.bf16.msra.mxu0 0
    %905 = vmatprep.subr.bf16.mxu0 0
    %906 = vmatpush1.bf16.msra.mxu0 0
    %907 = vmatprep.subr.bf16.mxu0 0
    %908 = vmatpush1.bf16.msra.mxu0 0
    %909 = vmatprep.subr.bf16.mxu0 0
    %910 = vmatpush1.bf16.msra.mxu0 0
    %911 = vmatprep.mubr.bf16.mxu0 0
    %912 = vmatmul.mubr.bf16.gmra.mrb[0].mxu0 %v797
    %v913 = vpop.f32.mrb[0].mxu0
    %v914 = vadd.f32 %v874, %v913
    %v915 = vpop.f32.mrb[0].mxu0
    %v916 = vpop.f32.mrb[0].mxu0
    %v917 = vpop.f32.mrb[0].mxu0
    %918 = vdwg.mxu0
    %v919 = vmax.f32 %v914, 0.0
    %v920 = vpack.c.bf16 %v919, %v919
    %s921 = scalar_lea.vmem %s3, 64
    %v922 = vld [vmem:[%s921] sm:$0xf]
    %v923 = vld [vmem:[%s921 + $0x4] sm:$0xf]
    %v924 = vld [vmem:[%s921 + $0x8] sm:$0xf]
    %v925 = vld [vmem:[%s921 + $0xc] sm:$0xf]
    %v926 = vld [vmem:[%s921 + $0x10] sm:$0xf]
    %v927 = vld [vmem:[%s921 + $0x14] sm:$0xf]
    %v928 = vld [vmem:[%s921 + $0x18] sm:$0xf]
    %v929 = vld [vmem:[%s921 + $0x1c] sm:$0xf]
    %v938 = vunpack.c.l.b16 %v922
    %v939 = vunpack.c.l.b16 %v923
    %v940 = vunpack.c.l.b16 %v924
    %v941 = vunpack.c.l.b16 %v925
    %v942 = vunpack.c.l.b16 %v926
    %v943 = vunpack.c.l.b16 %v927
    %v944 = vunpack.c.l.b16 %v928
    %v945 = vunpack.c.l.b16 %v929
    %v946 = vpack.c.b16 %v939, %v938
    %v947 = vpack.c.b16 %v941, %v940
    %v948 = vpack.c.b16 %v943, %v942
    %v949 = vpack.c.b16 %v945, %v944
    %v955 = vsel %vm344, %v920, 0
    %957 = vmatprep.subr.bf16.mxu0 0
    %958 = vmatpush1.bf16.msra.mxu0 %v946
    %959 = vmatprep.subr.bf16.mxu0 0
    %960 = vmatpush1.bf16.msra.mxu0 %v947
    %961 = vmatprep.subr.bf16.mxu0 0
    %962 = vmatpush1.bf16.msra.mxu0 %v948
    %963 = vmatprep.subr.bf16.mxu0 0
    %964 = vmatpush1.bf16.msra.mxu0 %v949
    %965 = vmatprep.subr.bf16.mxu0 0
    %966 = vmatpush1.bf16.msra.mxu0 0
    %967 = vmatprep.subr.bf16.mxu0 0
    %968 = vmatpush1.bf16.msra.mxu0 0
    %969 = vmatprep.subr.bf16.mxu0 0
    %970 = vmatpush1.bf16.msra.mxu0 0
    %971 = vmatprep.subr.bf16.mxu0 0
    %972 = vmatpush1.bf16.msra.mxu0 0
    %973 = vmatprep.subr.bf16.mxu0 0
    %974 = vmatpush1.bf16.msra.mxu0 0
    %975 = vmatprep.subr.bf16.mxu0 0
    %976 = vmatpush1.bf16.msra.mxu0 0
    %977 = vmatprep.subr.bf16.mxu0 0
    %978 = vmatpush1.bf16.msra.mxu0 0
    %979 = vmatprep.subr.bf16.mxu0 0
    %980 = vmatpush1.bf16.msra.mxu0 0
    %981 = vmatprep.subr.bf16.mxu0 0
    %982 = vmatpush1.bf16.msra.mxu0 0
    %983 = vmatprep.subr.bf16.mxu0 0
    %984 = vmatpush1.bf16.msra.mxu0 0
    %985 = vmatprep.subr.bf16.mxu0 0
    %986 = vmatpush1.bf16.msra.mxu0 0
    %987 = vmatprep.subr.bf16.mxu0 0
    %988 = vmatpush1.bf16.msra.mxu0 0
    %989 = vmatprep.mubr.bf16.mxu0 0
    %990 = vmatmul.mubr.bf16.gmra.mrb[0].mxu0 %v955
    %v991 = vpop.f32.mrb[0].mxu0
    %v992 = vadd.f32 0.0, %v991
    %v993 = vpop.f32.mrb[0].mxu0
    %v994 = vpop.f32.mrb[0].mxu0
    %v995 = vpop.f32.mrb[0].mxu0
    %996 = vdwg.mxu0
    %v997 = vadd.f32 %v766, %v992
    %v998 = vld [vmem:[%s0] sm:$0x88]
    %v999 = vld [vmem:[%s0 + $0x8] sm:$0x88]
    %v1000 = vld [vmem:[%s0 + $0x10] sm:$0x8]
    %v1004 = vunpack.c.l.b16 %v998
    %v1005 = vunpack.c.h.b16 %v998
    %v1006 = vunpack.c.l.b16 %v999
    %v1007 = vunpack.c.h.b16 %v999
    %v1008 = vunpack.c.l.b16 %v1000
    %v1009 = vpack.c.b16 %v1004, %v1004
    %v1010 = vpack.c.b16 %v1005, %v1005
    %v1011 = vpack.c.b16 %v1006, %v1006
    %v1012 = vpack.c.b16 %v1007, %v1007
    %v1013 = vpack.c.b16 %v1008, %v1008
    %v1014 = vrot.slane %v1009, 3
    %v1015 = vrot.slane %v1010, 3
    %v1016 = vrot.slane %v1011, 3
    %v1017 = vrot.slane %v1012, 3
    %v1018 = vrot.slane %v1013, 3
    %v1024 = vsel %vm344, %v1018, 0
    %1026 = vmatprep.subr.bf16.mxu0 0
    %1027 = vmatpush1.bf16.msra.mxu0 %v272
    %1028 = vmatprep.subr.bf16.mxu0 0
    %1029 = vmatpush1.bf16.msra.mxu0 %v273
    %1030 = vmatprep.subr.bf16.mxu0 0
    %1031 = vmatpush1.bf16.msra.mxu0 %v274
    %1032 = vmatprep.subr.bf16.mxu0 0
    %1033 = vmatpush1.bf16.msra.mxu0 %v275
    %1034 = vmatprep.subr.bf16.mxu0 0
    %1035 = vmatpush1.bf16.msra.mxu0 %v276
    %1036 = vmatprep.subr.bf16.mxu0 0
    %1037 = vmatpush1.bf16.msra.mxu0 %v277
    %1038 = vmatprep.subr.bf16.mxu0 0
    %1039 = vmatpush1.bf16.msra.mxu0 %v278
    %1040 = vmatprep.subr.bf16.mxu0 0
    %1041 = vmatpush1.bf16.msra.mxu0 %v279
    %1042 = vmatprep.subr.bf16.mxu0 0
    %1043 = vmatpush1.bf16.msra.mxu0 %v280
    %1044 = vmatprep.subr.bf16.mxu0 0
    %1045 = vmatpush1.bf16.msra.mxu0 %v281
    %1046 = vmatprep.subr.bf16.mxu0 0
    %1047 = vmatpush1.bf16.msra.mxu0 %v282
    %1048 = vmatprep.subr.bf16.mxu0 0
    %1049 = vmatpush1.bf16.msra.mxu0 %v283
    %1050 = vmatprep.subr.bf16.mxu0 0
    %1051 = vmatpush1.bf16.msra.mxu0 %v284
    %1052 = vmatprep.subr.bf16.mxu0 0
    %1053 = vmatpush1.bf16.msra.mxu0 %v285
    %1054 = vmatprep.subr.bf16.mxu0 0
    %1055 = vmatpush1.bf16.msra.mxu0 %v286
    %1056 = vmatprep.subr.bf16.mxu0 0
    %1057 = vmatpush1.bf16.msra.mxu0 %v287
    %1058 = vmatprep.mubr.bf16.mxu0 %v1015
    %1059 = vmatmul.mubr.bf16.gmra.mrb[0].mxu0 %v1014
    %v1060 = vpop.f32.mrb[0].mxu0
    %v1061 = vadd.f32 %v109, %v1060
    %v1062 = vpop.f32.mrb[0].mxu0
    %v1063 = vpop.f32.mrb[0].mxu0
    %v1064 = vpop.f32.mrb[0].mxu0
    %1065 = vdwg.mxu0
    %1066 = vmatprep.subr.bf16.mxu0 0
    %1067 = vmatpush1.bf16.msra.mxu0 %v288
    %1068 = vmatprep.subr.bf16.mxu0 0
    %1069 = vmatpush1.bf16.msra.mxu0 %v289
    %1070 = vmatprep.subr.bf16.mxu0 0
    %1071 = vmatpush1.bf16.msra.mxu0 %v290
    %1072 = vmatprep.subr.bf16.mxu0 0
    %1073 = vmatpush1.bf16.msra.mxu0 %v291
    %1074 = vmatprep.subr.bf16.mxu0 0
    %1075 = vmatpush1.bf16.msra.mxu0 %v292
    %1076 = vmatprep.subr.bf16.mxu0 0
    %1077 = vmatpush1.bf16.msra.mxu0 %v293
    %1078 = vmatprep.subr.bf16.mxu0 0
    %1079 = vmatpush1.bf16.msra.mxu0 %v294
    %1080 = vmatprep.subr.bf16.mxu0 0
    %1081 = vmatpush1.bf16.msra.mxu0 %v295
    %1082 = vmatprep.subr.bf16.mxu0 0
    %1083 = vmatpush1.bf16.msra.mxu0 %v296
    %1084 = vmatprep.subr.bf16.mxu0 0
    %1085 = vmatpush1.bf16.msra.mxu0 %v297
    %1086 = vmatprep.subr.bf16.mxu0 0
    %1087 = vmatpush1.bf16.msra.mxu0 %v298
    %1088 = vmatprep.subr.bf16.mxu0 0
    %1089 = vmatpush1.bf16.msra.mxu0 %v299
    %1090 = vmatprep.subr.bf16.mxu0 0
    %1091 = vmatpush1.bf16.msra.mxu0 %v300
    %1092 = vmatprep.subr.bf16.mxu0 0
    %1093 = vmatpush1.bf16.msra.mxu0 %v301
    %1094 = vmatprep.subr.bf16.mxu0 0
    %1095 = vmatpush1.bf16.msra.mxu0 %v302
    %1096 = vmatprep.subr.bf16.mxu0 0
    %1097 = vmatpush1.bf16.msra.mxu0 %v303
    %1098 = vmatprep.mubr.bf16.mxu0 %v1017
    %1099 = vmatmul.mubr.bf16.gmra.mrb[0].mxu0 %v1016
    %v1100 = vpop.f32.mrb[0].mxu0
    %v1101 = vadd.f32 %v1061, %v1100
    %v1102 = vpop.f32.mrb[0].mxu0
    %v1103 = vpop.f32.mrb[0].mxu0
    %v1104 = vpop.f32.mrb[0].mxu0
    %1105 = vdwg.mxu0
    %1106 = vmatprep.subr.bf16.mxu0 0
    %1107 = vmatpush1.bf16.msra.mxu0 %v304
    %1108 = vmatprep.subr.bf16.mxu0 0
    %1109 = vmatpush1.bf16.msra.mxu0 %v305
    %1110 = vmatprep.subr.bf16.mxu0 0
    %1111 = vmatpush1.bf16.msra.mxu0 %v306
    %1112 = vmatprep.subr.bf16.mxu0 0
    %1113 = vmatpush1.bf16.msra.mxu0 %v307
    %1114 = vmatprep.subr.bf16.mxu0 0
    %1115 = vmatpush1.bf16.msra.mxu0 0
    %1116 = vmatprep.subr.bf16.mxu0 0
    %1117 = vmatpush1.bf16.msra.mxu0 0
    %1118 = vmatprep.subr.bf16.mxu0 0
    %1119 = vmatpush1.bf16.msra.mxu0 0
    %1120 = vmatprep.subr.bf16.mxu0 0
    %1121 = vmatpush1.bf16.msra.mxu0 0
    %1122 = vmatprep.subr.bf16.mxu0 0
    %1123 = vmatpush1.bf16.msra.mxu0 0
    %1124 = vmatprep.subr.bf16.mxu0 0
    %1125 = vmatpush1.bf16.msra.mxu0 0
    %1126 = vmatprep.subr.bf16.mxu0 0
    %1127 = vmatpush1.bf16.msra.mxu0 0
    %1128 = vmatprep.subr.bf16.mxu0 0
    %1129 = vmatpush1.bf16.msra.mxu0 0
    %1130 = vmatprep.subr.bf16.mxu0 0
    %1131 = vmatpush1.bf16.msra.mxu0 0
    %1132 = vmatprep.subr.bf16.mxu0 0
    %1133 = vmatpush1.bf16.msra.mxu0 0
    %1134 = vmatprep.subr.bf16.mxu0 0
    %1135 = vmatpush1.bf16.msra.mxu0 0
    %1136 = vmatprep.subr.bf16.mxu0 0
    %1137 = vmatpush1.bf16.msra.mxu0 0
    %1138 = vmatprep.mubr.bf16.mxu0 0
    %1139 = vmatmul.mubr.bf16.gmra.mrb[0].mxu0 %v1024
    %v1140 = vpop.f32.mrb[0].mxu0
    %v1141 = vadd.f32 %v1101, %v1140
    %v1142 = vpop.f32.mrb[0].mxu0
    %v1143 = vpop.f32.mrb[0].mxu0
    %v1144 = vpop.f32.mrb[0].mxu0
    %1145 = vdwg.mxu0
    %v1146 = vmax.f32 %v1141, 0.0
    %v1147 = vpack.c.bf16 %v1146, %v1146
    %s1148 = scalar_lea.vmem %s3, 96
    %v1149 = vld [vmem:[%s1148] sm:$0xf]
    %v1150 = vld [vmem:[%s1148 + $0x4] sm:$0xf]
    %v1151 = vld [vmem:[%s1148 + $0x8] sm:$0xf]
    %v1152 = vld [vmem:[%s1148 + $0xc] sm:$0xf]
    %v1153 = vld [vmem:[%s1148 + $0x10] sm:$0xf]
    %v1154 = vld [vmem:[%s1148 + $0x14] sm:$0xf]
    %v1155 = vld [vmem:[%s1148 + $0x18] sm:$0xf]
    %v1156 = vld [vmem:[%s1148 + $0x1c] sm:$0xf]
    %v1165 = vunpack.c.l.b16 %v1149
    %v1166 = vunpack.c.l.b16 %v1150
    %v1167 = vunpack.c.l.b16 %v1151
    %v1168 = vunpack.c.l.b16 %v1152
    %v1169 = vunpack.c.l.b16 %v1153
    %v1170 = vunpack.c.l.b16 %v1154
    %v1171 = vunpack.c.l.b16 %v1155
    %v1172 = vunpack.c.l.b16 %v1156
    %v1173 = vpack.c.b16 %v1166, %v1165
    %v1174 = vpack.c.b16 %v1168, %v1167
    %v1175 = vpack.c.b16 %v1170, %v1169
    %v1176 = vpack.c.b16 %v1172, %v1171
    %v1182 = vsel %vm344, %v1147, 0
    %1184 = vmatprep.subr.bf16.mxu0 0
    %1185 = vmatpush1.bf16.msra.mxu0 %v1173
    %1186 = vmatprep.subr.bf16.mxu0 0
    %1187 = vmatpush1.bf16.msra.mxu0 %v1174
    %1188 = vmatprep.subr.bf16.mxu0 0
    %1189 = vmatpush1.bf16.msra.mxu0 %v1175
    %1190 = vmatprep.subr.bf16.mxu0 0
    %1191 = vmatpush1.bf16.msra.mxu0 %v1176
    %1192 = vmatprep.subr.bf16.mxu0 0
    %1193 = vmatpush1.bf16.msra.mxu0 0
    %1194 = vmatprep.subr.bf16.mxu0 0
    %1195 = vmatpush1.bf16.msra.mxu0 0
    %1196 = vmatprep.subr.bf16.mxu0 0
    %1197 = vmatpush1.bf16.msra.mxu0 0
    %1198 = vmatprep.subr.bf16.mxu0 0
    %1199 = vmatpush1.bf16.msra.mxu0 0
    %1200 = vmatprep.subr.bf16.mxu0 0
    %1201 = vmatpush1.bf16.msra.mxu0 0
    %1202 = vmatprep.subr.bf16.mxu0 0
    %1203 = vmatpush1.bf16.msra.mxu0 0
    %1204 = vmatprep.subr.bf16.mxu0 0
    %1205 = vmatpush1.bf16.msra.mxu0 0
    %1206 = vmatprep.subr.bf16.mxu0 0
    %1207 = vmatpush1.bf16.msra.mxu0 0
    %1208 = vmatprep.subr.bf16.mxu0 0
    %1209 = vmatpush1.bf16.msra.mxu0 0
    %1210 = vmatprep.subr.bf16.mxu0 0
    %1211 = vmatpush1.bf16.msra.mxu0 0
    %1212 = vmatprep.subr.bf16.mxu0 0
    %1213 = vmatpush1.bf16.msra.mxu0 0
    %1214 = vmatprep.subr.bf16.mxu0 0
    %1215 = vmatpush1.bf16.msra.mxu0 0
    %1216 = vmatprep.mubr.bf16.mxu0 0
    %1217 = vmatmul.mubr.bf16.gmra.mrb[0].mxu0 %v1182
    %v1218 = vpop.f32.mrb[0].mxu0
    %v1219 = vadd.f32 0.0, %v1218
    %v1220 = vpop.f32.mrb[0].mxu0
    %v1221 = vpop.f32.mrb[0].mxu0
    %v1222 = vpop.f32.mrb[0].mxu0
    %1223 = vdwg.mxu0
    %v1224 = vadd.f32 %v997, %v1219
    %v1226 = vlaneseq
    %v1227 = vshrl.u32 %v1226, 7
    %v1228 = vsub.s32 0, %v1227
    %v1229 = vrot.slane %v101, %v1228
    %v1231 = vadd.f32 %v1224, %v1229
    %v1232 = vmax.f32 %v1231, 0.0
    %v1233 = vpack.c.bf16 %v1232, %v1232
    %v1234 = vld [vmem:[%s5] sm:$0xf]
    %v1235 = vld [vmem:[%s5 + $0x4] sm:$0xf]
    %v1236 = vld [vmem:[%s5 + $0x8] sm:$0xf]
    %v1237 = vld [vmem:[%s5 + $0xc] sm:$0xf]
    %v1238 = vld [vmem:[%s5 + $0x10] sm:$0xf]
    %v1239 = vld [vmem:[%s5 + $0x14] sm:$0xf]
    %v1240 = vld [vmem:[%s5 + $0x18] sm:$0xf]
    %v1241 = vld [vmem:[%s5 + $0x1c] sm:$0xf]
    %v1242 = vld [vmem:[%s6] sm:$0x1]
    %v1244 = vlaneseq
    %v1245 = vshrl.u32 %v1244, 7
    %v1246 = vsub.s32 0, %v1245
    %v1247 = vrot.slane %v1242, %v1246
    %v1257 = vunpack.c.l.b16 %v1234
    %v1258 = vunpack.c.l.b16 %v1235
    %v1259 = vunpack.c.l.b16 %v1236
    %v1260 = vunpack.c.l.b16 %v1237
    %v1261 = vunpack.c.l.b16 %v1238
    %v1262 = vunpack.c.l.b16 %v1239
    %v1263 = vunpack.c.l.b16 %v1240
    %v1264 = vunpack.c.l.b16 %v1241
    %v1265 = vpack.c.b16 %v1258, %v1257
    %v1266 = vpack.c.b16 %v1260, %v1259
    %v1267 = vpack.c.b16 %v1262, %v1261
    %v1268 = vpack.c.b16 %v1264, %v1263
    %v1274 = vsel %vm344, %v1233, 0
    %1276 = vmatprep.subr.bf16.mxu0 0
    %1277 = vmatpush1.bf16.msra.mxu0 %v1265
    %1278 = vmatprep.subr.bf16.mxu0 0
    %1279 = vmatpush1.bf16.msra.mxu0 %v1266
    %1280 = vmatprep.subr.bf16.mxu0 0
    %1281 = vmatpush1.bf16.msra.mxu0 %v1267
    %1282 = vmatprep.subr.bf16.mxu0 0
    %1283 = vmatpush1.bf16.msra.mxu0 %v1268
    %1284 = vmatprep.subr.bf16.mxu0 0
    %1285 = vmatpush1.bf16.msra.mxu0 0
    %1286 = vmatprep.subr.bf16.mxu0 0
    %1287 = vmatpush1.bf16.msra.mxu0 0
    %1288 = vmatprep.subr.bf16.mxu0 0
    %1289 = vmatpush1.bf16.msra.mxu0 0
    %1290 = vmatprep.subr.bf16.mxu0 0
    %1291 = vmatpush1.bf16.msra.mxu0 0
    %1292 = vmatprep.subr.bf16.mxu0 0
    %1293 = vmatpush1.bf16.msra.mxu0 0
    %1294 = vmatprep.subr.bf16.mxu0 0
    %1295 = vmatpush1.bf16.msra.mxu0 0
    %1296 = vmatprep.subr.bf16.mxu0 0
    %1297 = vmatpush1.bf16.msra.mxu0 0
    %1298 = vmatprep.subr.bf16.mxu0 0
    %1299 = vmatpush1.bf16.msra.mxu0 0
    %1300 = vmatprep.subr.bf16.mxu0 0
    %1301 = vmatpush1.bf16.msra.mxu0 0
    %1302 = vmatprep.subr.bf16.mxu0 0
    %1303 = vmatpush1.bf16.msra.mxu0 0
    %1304 = vmatprep.subr.bf16.mxu0 0
    %1305 = vmatpush1.bf16.msra.mxu0 0
    %1306 = vmatprep.subr.bf16.mxu0 0
    %1307 = vmatpush1.bf16.msra.mxu0 0
    %1308 = vmatprep.mubr.bf16.mxu0 0
    %1309 = vmatmul.mubr.bf16.gmra.mrb[0].mxu0 %v1274
    %v1310 = vpop.f32.mrb[0].mxu0
    %v1311 = vadd.f32 %v1247, %v1310
    %v1312 = vpop.f32.mrb[0].mxu0
    %v1313 = vpop.f32.mrb[0].mxu0
    %v1314 = vpop.f32.mrb[0].mxu0
    %1315 = vdwg.mxu0
    %vm1316 = vcmask 58368
    %1317 = vst.msk [vmem:[#allocation2] sm:$0x3] %vm1316, %v1311
    // Predicated region
    $region30: #{sonic_cnn_forward.5} parent=1 // pred_check
      _
    $region31: #{sonic_cnn_forward.5} parent=1 // pred_check_branch
      %1319 = sbr.rel (0) target = $region33
    $region32: #{sonic_cnn_forward.5} parent=1 // pred_region
      %s1321 = ssub.s32 32, 32
      %1322 = vsyncadd [#allocation3], %s1321
      %s1324 = sshll.u32 [#allocation2], 4
      %s1325 = int_to_ptr.vmem [resolvable:$true] %s1324
      %1327 = dma.vmem_to_hbm [thread:$0]  %s1325, 32, %s7, [#allocation3]
    $region33: #{sonic_cnn_forward.5} parent=1 // pred_fallthru
      _
    // Predicated region
    $region34: #{sonic_cnn_forward.5} parent=1 // pred_check
      _
    $region35: #{sonic_cnn_forward.5} parent=1 // pred_check_branch
      %1329 = sbr.rel (0) target = $region37
    $region36: #{sonic_cnn_forward.5} parent=1 // pred_region
      %1330 = dma.done [#allocation3], 32
    $region37: #{sonic_cnn_forward.5} parent=1 // pred_fallthru
      _
    %1331 = vsyncpa [#allocation3], 1

</llo_original>
